<compile_context>
chip_gen: v7x
topology: tpu7x:2x2x1
jax: 0.10.0
libtpu: 0.0.40
codegen_flags: <defaults>
</compile_context>

<pallas_src>
import functools

import jax
import jax.numpy as jnp
from jax import lax
from jax.experimental import pallas as pl
from jax.experimental.pallas import tpu as pltpu


# ------------------------------ fused kernel -------------------------------

def _fused_rel_attn_kernel(w_ref, wqkv_ref, wo_ref, remb_ref, rwb_ref,
                           rbias_ref, o_ref, *, n_head, d_head, scale):
    # w_ref:    [Q, d_model]  f32   (block for the current batch element)
    # wqkv_ref: [d_model, 3*H*D] bf16   (full, grid-invariant)
    # wo_ref:   [H, D, d_model] bf16    (full, grid-invariant)
    # remb_ref: [K, H*D] bf16           (full, grid-invariant)
    # rwb_ref:  [1, H*D] f32            (r_w_bias, flattened)
    # rbias_ref:[H, K] f32
    # o_ref:    [Q, d_model] f32
    f32, bf16 = jnp.float32, jnp.bfloat16
    Q, d_model = w_ref.shape
    K = remb_ref.shape[0]
    H, D = n_head, d_head
    HD = H * D
    HQ = H * Q

    # ---- QKV projection: bf16 MXU operands, f32 accumulation ----
    heads = jnp.dot(w_ref[...].astype(bf16), wqkv_ref[...],
                    preferred_element_type=f32)              # [Q, 3*H*D] f32

    q_all = heads[:, :HD]                                    # [Q, H*D]
    k_all = heads[:, HD:2 * HD]                              # [K, H*D]
    v_all = heads[:, 2 * HD:]                                # [K, H*D]
    rwq_all = q_all + rwb_ref[...]            # q + r_w_bias, hoisted (1 add)

    q_bf = q_all.astype(bf16)
    rwq_bf = rwq_all.astype(bf16)
    k_bf = k_all.astype(bf16)
    v_bf = v_all.astype(bf16)
    remb = remb_ref[...]                                     # [K, H*D] bf16
    rb = rbias_ref[...]                                      # [H, K]   f32

    # ---- per-head AC and (B_ + D_), stacked along sublanes ----
    dn = (((1,), (1,)), ((), ()))          # contract last dims (NT matmul)
    ac_parts, bd_parts = [], []
    for h in range(H):                      # static unroll, n_head is small
        lo = h * D
        ac_parts.append(
            lax.dot_general(rwq_bf[:, lo:lo + D], k_bf[:, lo:lo + D], dn,
                            preferred_element_type=f32))        # [Q, K]
        b_h = lax.dot_general(q_bf[:, lo:lo + D], remb[:, lo:lo + D], dn,
                              preferred_element_type=f32)        # [Q, K]
        bd_parts.append(b_h + rb[h:h + 1, :])                    # + D_
    ac_all = jnp.concatenate(ac_parts, axis=0)                   # [H*Q, K]
    bd_pre = jnp.concatenate(bd_parts, axis=0)                   # [H*Q, K]

    # ---- relative shift: ONE log2(K) shear for ALL heads (exact torch
    #      pad/view semantics for klen == qlen, incl. the unmasked wrap) ----
    # out[r, j] = x2[r, j + (K-1 - (r % Q))],  x2 = [x | zero-col | next-row]
    w_pad = ((2 * K + 1 + 127) // 128) * 128     # lane-pad to a 128 multiple
    x_next = jnp.concatenate(
        [bd_pre[1:, :], jnp.zeros((1, K), f32)], axis=0)         # row r -> r+1
    x2 = jnp.concatenate(
        [bd_pre, jnp.zeros((HQ, 1), f32), x_next,
         jnp.zeros((HQ, w_pad - (2 * K + 1)), f32)], axis=1)     # [H*Q, w_pad]

    row = lax.broadcasted_iota(jnp.int32, (HQ, 1), 0)
    shift = (K - 1) - (row % Q)              # per-row left shift (hoisted)
    cur = x2
    b = 1
    while b < K:                             # log2(K) static steps
        rolled = pltpu.roll(cur, w_pad - b, 1)   # XLU lane left-roll by b
        cur = jnp.where((shift & b) != 0, rolled, cur)
        b *= 2
    bd_all = cur[:, :K]                                          # [H*Q, K]

    # ---- scale + softmax over klen (f32 VPU / EUP), all heads at once ----
    score = (ac_all + bd_all) * scale                            # [H*Q, K]
    m = jnp.max(score, axis=-1, keepdims=True)
    p = jnp.exp(score - m)
    denom = jnp.sum(p, axis=-1, keepdims=True)
    prob = p * pl.reciprocal(denom, approx=True)                 # EUP slot
    prob_bf = prob.astype(bf16)

    # ---- prob @ V and per-head-accumulated output projection ----
    wo = wo_ref[...]                                             # [H, D, M]
    out = jnp.zeros((Q, d_model), f32)
    for h in range(H):
        lo = h * D
        attn_h = jnp.dot(prob_bf[h * Q:(h + 1) * Q, :], v_bf[:, lo:lo + D],
                         preferred_element_type=f32)             # [Q, D]
        out = out + jnp.dot(attn_h.astype(bf16), wo[h],
                            preferred_element_type=f32)          # [Q, M]
    o_ref[...] = out.astype(o_ref.dtype)


# ------------------------------ wrapper -------------------------------------

def rel_learnable_mha_pallas(w, r_emb, r_w_bias, r_bias, W_qkv, W_o,
                             n_head, d_head):
    qlen, bsz, d_model = w.shape
    klen = qlen                      # mems is None in this forward
    assert r_emb.shape[0] >= klen and r_bias.shape[0] >= klen
    HD = n_head * d_head
    scale = 1.0 / d_head ** 0.5

    # One-time parameter prep: last-klen slice, lane-dense shaping, bf16 for
    # all MXU-operand weights (f32 kept for the bias terms added on the VPU).
    W_qkv_bf = W_qkv.astype(jnp.bfloat16)                          # [M, 3*H*D]
    W_o_hdm = W_o.reshape(n_head, d_head, d_model).astype(jnp.bfloat16)
    r_emb_k = r_emb[-klen:].reshape(klen, HD).astype(jnp.bfloat16)  # [K, H*D]
    r_w_bias_f = r_w_bias.reshape(1, HD).astype(jnp.float32)        # [1, H*D]
    r_bias_hk = jnp.transpose(r_bias[-klen:], (1, 0)).astype(jnp.float32)

    # time-major -> batch-major activations (cheap glue; see header note on
    # why the transpose-free squeezed-batch BlockSpec was not used at bsz=2).
    w_bqm = jnp.transpose(w, (1, 0, 2))                 # [bsz, qlen, d_model]

    kernel = functools.partial(_fused_rel_attn_kernel, n_head=n_head,
                               d_head=d_head, scale=scale)

    flops = bsz * (2 * qlen * d_model * 3 * HD                  # QKV proj
                   + n_head * 2 * qlen * klen * d_head * 3      # AC, B_, P@V
                   + 2 * qlen * HD * d_model)                   # out proj
    bytes_accessed = (qlen * bsz * d_model * 4 * 2              # w + out
                      + d_model * 3 * HD * 2 + HD * d_model * 2
                      + klen * HD * 2 + HD * 4 + n_head * klen * 4)
    cost = pl.CostEstimate(flops=flops,
                           transcendentals=bsz * n_head * qlen * klen,
                           bytes_accessed=bytes_accessed)

    out_bqm = pl.pallas_call(
        kernel,
        out_shape=jax.ShapeDtypeStruct((bsz, qlen, d_model), jnp.float32),
        grid=(bsz,),
        in_specs=[
            pl.BlockSpec((None, qlen, d_model), lambda b: (b, 0, 0)),
            pl.BlockSpec((d_model, 3 * HD), lambda b: (0, 0)),
            pl.BlockSpec((n_head, d_head, d_model), lambda b: (0, 0, 0)),
            pl.BlockSpec((klen, HD), lambda b: (0, 0)),
            pl.BlockSpec((1, HD), lambda b: (0, 0)),
            pl.BlockSpec((n_head, klen), lambda b: (0, 0)),
        ],
        out_specs=pl.BlockSpec((None, qlen, d_model), lambda b: (b, 0, 0)),
        compiler_params=pltpu.CompilerParams(
            dimension_semantics=("parallel",),
            vmem_limit_bytes=64 * 1024 * 1024),
        cost_estimate=cost,
    )(w_bqm, W_qkv_bf, W_o_hdm, r_emb_k, r_w_bias_f, r_bias_hk)

    return jnp.transpose(out_bqm, (1, 0, 2))            # [qlen, bsz, d_model]


# ----------------------------- pure-JAX reference ---------------------------

def _rel_shift_ref(x):
    Q, K, B, N = x.shape
    zero_pad = jnp.zeros((Q, 1, B, N), x.dtype)
    xp = jnp.concatenate([zero_pad, x], axis=1).reshape(K + 1, Q, B, N)
    return xp[1:].reshape(Q, K, B, N)


def reference_forward(w, r_emb, r_w_bias, r_bias, W_qkv, W_o, n_head, d_head):
    qlen, bsz, d_model = w.shape
    scale = 1.0 / d_head ** 0.5
    w_heads = jnp.einsum('ibm,mo->ibo', w, W_qkv)
    q, k, v = jnp.split(w_heads, 3, axis=-1)
    klen = k.shape[0]
    q = q.reshape(qlen, bsz, n_head, d_head)
    k = k.reshape(klen, bsz, n_head, d_head)
    v = v.reshape(klen, bsz, n_head, d_head)
    r_emb_k = r_emb[-klen:]
    r_bias_k = r_bias[-klen:]
    rw_q = q + r_w_bias[None]
    AC = jnp.einsum('ibnd,jbnd->ijbn', rw_q, k)
    B_ = jnp.einsum('ibnd,jnd->ijbn', q, r_emb_k)
    D_ = r_bias_k[None, :, None]
    BD = _rel_shift_ref(B_ + D_)
    attn_score = (AC + BD) * scale
    attn_prob = jax.nn.softmax(attn_score, axis=1)
    attn_vec = jnp.einsum('ijbn,jbnd->ibnd', attn_prob, v)
    attn_vec = attn_vec.reshape(qlen, bsz, n_head * d_head)
    return jnp.einsum('ibh,hm->ibm', attn_vec, W_o)


# ----------------------------------- main -----------------------------------

if __name__ == "__main__":
    qlen, bsz = 8, 2
    n_head, d_head = 4, 8
    d_model = 32
    klen = qlen

    key = jax.random.PRNGKey(0)
    k1, k2, k3, k4, k5, k6 = jax.random.split(key, 6)
    w = jax.random.normal(k1, (qlen, bsz, d_model), jnp.float32)
    r_emb = 0.5 * jax.random.normal(k2, (klen, n_head, d_head), jnp.float32)
    r_w_bias = 0.5 * jax.random.normal(k3, (n_head, d_head), jnp.float32)
    r_bias = 0.5 * jax.random.normal(k4, (klen, n_head), jnp.float32)
    # nn.Linear weights (stored as [in, out], i.e. transpose of torch's weight)
    W_qkv = 0.1 * jax.random.normal(k5, (d_model, 3 * n_head * d_head), jnp.float32)
    W_o = 0.1 * jax.random.normal(k6, (n_head * d_head, d_model), jnp.float32)

    out = rel_learnable_mha_pallas(w, r_emb, r_w_bias, r_bias, W_qkv, W_o,
                                   n_head, d_head)
    out = jax.block_until_ready(out)

    ref = reference_forward(w, r_emb, r_w_bias, r_bias, W_qkv, W_o,
                            n_head, d_head)
    ref = jax.block_until_ready(ref)

    assert out.shape == (qlen, bsz, d_model), out.shape
    max_err = float(jnp.max(jnp.abs(out - ref)))
    # bf16 MXU operands + approx softmax reciprocal -> ~1e-2-level tolerance.
    assert jnp.allclose(out, ref, rtol=2e-2, atol=2e-2), f"max_err={max_err}"
    print("KERNEL_OK")
</pallas_src>

<mosaic_0001>
module attributes {stable_mosaic.version = 11 : i64} {
  func.func @_fused_rel_attn_kernel(%arg0: i32, %arg1: memref<1x8x32xf32, #tpu.memory_space<vmem>>, %arg2: memref<32x96xbf16, #tpu.memory_space<vmem>>, %arg3: memref<4x8x32xbf16, #tpu.memory_space<vmem>>, %arg4: memref<8x32xbf16, #tpu.memory_space<vmem>>, %arg5: memref<1x32xf32, #tpu.memory_space<vmem>>, %arg6: memref<4x8xf32, #tpu.memory_space<vmem>>, %arg7: memref<1x8x32xf32, #tpu.memory_space<vmem>>) attributes {dimension_semantics = [#tpu.dimension_semantics<parallel>], iteration_bounds = array<i64: 2>, scalar_prefetch = 0 : i64, scratch_operands = 0 : i64, tpu.core_type = #tpu.core_type<tc>, window_params = [{transform_indices = @transform_0, window_bounds = array<i64: 1, 8, 32>}, {pipeline_mode = #tpu.pipeline_mode<synchronous>, transform_indices = @transform_1, window_bounds = array<i64: 32, 96>}, {pipeline_mode = #tpu.pipeline_mode<synchronous>, transform_indices = @transform_2, window_bounds = array<i64: 4, 8, 32>}, {pipeline_mode = #tpu.pipeline_mode<synchronous>, transform_indices = @transform_3, window_bounds = array<i64: 8, 32>}, {pipeline_mode = #tpu.pipeline_mode<synchronous>, transform_indices = @transform_4, window_bounds = array<i64: 1, 32>}, {pipeline_mode = #tpu.pipeline_mode<synchronous>, transform_indices = @transform_5, window_bounds = array<i64: 4, 8>}, {transform_indices = @transform_6, window_bounds = array<i64: 1, 8, 32>}]} {
    %c0 = arith.constant 0 : index
    %c0_0 = arith.constant 0 : index
    %c0_1 = arith.constant 0 : index
    %0 = vector.load %arg1[%c0, %c0_0, %c0_1] : memref<1x8x32xf32, #tpu.memory_space<vmem>>, vector<1x8x32xf32>
    %1 = vector.shape_cast %0 : vector<1x8x32xf32> to vector<8x32xf32>
    %2 = arith.truncf %1 : vector<8x32xf32> to vector<8x32xbf16>
    %c0_2 = arith.constant 0 : index
    %c0_3 = arith.constant 0 : index
    %3 = vector.load %arg2[%c0_2, %c0_3] : memref<32x96xbf16, #tpu.memory_space<vmem>>, vector<32x96xbf16>
    %cst = arith.constant dense<0.000000e+00> : vector<8x96xf32>
    %4 = tpu.matmul %2, %3, %cst {dimension_numbers = #tpu.dot_dimension_numbers<[1], [0], [0], [1], [0, 0, 1, 1], [], []>} : vector<8x32xbf16>, vector<32x96xbf16>, vector<8x96xf32> -> vector<8x96xf32>
    %5 = vector.extract_strided_slice %4 {offsets = [0, 0], sizes = [8, 32], strides = [1, 1]} : vector<8x96xf32> to vector<8x32xf32>
    %6 = vector.extract_strided_slice %4 {offsets = [0, 32], sizes = [8, 32], strides = [1, 1]} : vector<8x96xf32> to vector<8x32xf32>
    %7 = vector.extract_strided_slice %4 {offsets = [0, 64], sizes = [8, 32], strides = [1, 1]} : vector<8x96xf32> to vector<8x32xf32>
    %c0_4 = arith.constant 0 : index
    %c0_5 = arith.constant 0 : index
    %8 = vector.load %arg5[%c0_4, %c0_5] : memref<1x32xf32, #tpu.memory_space<vmem>>, vector<1x32xf32>
    %9 = vector.broadcast %8 : vector<1x32xf32> to vector<8x32xf32>
    %10 = arith.addf %5, %9 : vector<8x32xf32>
    %11 = arith.truncf %5 : vector<8x32xf32> to vector<8x32xbf16>
    %12 = arith.truncf %10 : vector<8x32xf32> to vector<8x32xbf16>
    %13 = arith.truncf %6 : vector<8x32xf32> to vector<8x32xbf16>
    %14 = arith.truncf %7 : vector<8x32xf32> to vector<8x32xbf16>
    %c0_6 = arith.constant 0 : index
    %c0_7 = arith.constant 0 : index
    %15 = vector.load %arg4[%c0_6, %c0_7] : memref<8x32xbf16, #tpu.memory_space<vmem>>, vector<8x32xbf16>
    %c0_8 = arith.constant 0 : index
    %c0_9 = arith.constant 0 : index
    %16 = vector.load %arg6[%c0_8, %c0_9] : memref<4x8xf32, #tpu.memory_space<vmem>>, vector<4x8xf32>
    %17 = vector.extract_strided_slice %12 {offsets = [0, 0], sizes = [8, 8], strides = [1, 1]} : vector<8x32xbf16> to vector<8x8xbf16>
    %18 = vector.extract_strided_slice %13 {offsets = [0, 0], sizes = [8, 8], strides = [1, 1]} : vector<8x32xbf16> to vector<8x8xbf16>
    %cst_10 = arith.constant dense<0.000000e+00> : vector<8x8xf32>
    %19 = tpu.matmul %17, %18, %cst_10 {dimension_numbers = #tpu.dot_dimension_numbers<[1], [1], [0], [0], [0, 0, 1, 0], [], []>} : vector<8x8xbf16>, vector<8x8xbf16>, vector<8x8xf32> -> vector<8x8xf32>
    %20 = vector.extract_strided_slice %11 {offsets = [0, 0], sizes = [8, 8], strides = [1, 1]} : vector<8x32xbf16> to vector<8x8xbf16>
    %21 = vector.extract_strided_slice %15 {offsets = [0, 0], sizes = [8, 8], strides = [1, 1]} : vector<8x32xbf16> to vector<8x8xbf16>
    %cst_11 = arith.constant dense<0.000000e+00> : vector<8x8xf32>
    %22 = tpu.matmul %20, %21, %cst_11 {dimension_numbers = #tpu.dot_dimension_numbers<[1], [1], [0], [0], [0, 0, 1, 0], [], []>} : vector<8x8xbf16>, vector<8x8xbf16>, vector<8x8xf32> -> vector<8x8xf32>
    %23 = vector.extract_strided_slice %16 {offsets = [0, 0], sizes = [1, 8], strides = [1, 1]} : vector<4x8xf32> to vector<1x8xf32>
    %24 = vector.broadcast %23 : vector<1x8xf32> to vector<8x8xf32>
    %25 = arith.addf %22, %24 : vector<8x8xf32>
    %26 = vector.extract_strided_slice %12 {offsets = [0, 8], sizes = [8, 8], strides = [1, 1]} : vector<8x32xbf16> to vector<8x8xbf16>
    %27 = vector.extract_strided_slice %13 {offsets = [0, 8], sizes = [8, 8], strides = [1, 1]} : vector<8x32xbf16> to vector<8x8xbf16>
    %cst_12 = arith.constant dense<0.000000e+00> : vector<8x8xf32>
    %28 = tpu.matmul %26, %27, %cst_12 {dimension_numbers = #tpu.dot_dimension_numbers<[1], [1], [0], [0], [0, 0, 1, 0], [], []>} : vector<8x8xbf16>, vector<8x8xbf16>, vector<8x8xf32> -> vector<8x8xf32>
    %29 = vector.extract_strided_slice %11 {offsets = [0, 8], sizes = [8, 8], strides = [1, 1]} : vector<8x32xbf16> to vector<8x8xbf16>
    %30 = vector.extract_strided_slice %15 {offsets = [0, 8], sizes = [8, 8], strides = [1, 1]} : vector<8x32xbf16> to vector<8x8xbf16>
    %cst_13 = arith.constant dense<0.000000e+00> : vector<8x8xf32>
    %31 = tpu.matmul %29, %30, %cst_13 {dimension_numbers = #tpu.dot_dimension_numbers<[1], [1], [0], [0], [0, 0, 1, 0], [], []>} : vector<8x8xbf16>, vector<8x8xbf16>, vector<8x8xf32> -> vector<8x8xf32>
    %32 = vector.extract_strided_slice %16 {offsets = [1, 0], sizes = [1, 8], strides = [1, 1]} : vector<4x8xf32> to vector<1x8xf32>
    %33 = vector.broadcast %32 : vector<1x8xf32> to vector<8x8xf32>
    %34 = arith.addf %31, %33 : vector<8x8xf32>
    %35 = vector.extract_strided_slice %12 {offsets = [0, 16], sizes = [8, 8], strides = [1, 1]} : vector<8x32xbf16> to vector<8x8xbf16>
    %36 = vector.extract_strided_slice %13 {offsets = [0, 16], sizes = [8, 8], strides = [1, 1]} : vector<8x32xbf16> to vector<8x8xbf16>
    %cst_14 = arith.constant dense<0.000000e+00> : vector<8x8xf32>
    %37 = tpu.matmul %35, %36, %cst_14 {dimension_numbers = #tpu.dot_dimension_numbers<[1], [1], [0], [0], [0, 0, 1, 0], [], []>} : vector<8x8xbf16>, vector<8x8xbf16>, vector<8x8xf32> -> vector<8x8xf32>
    %38 = vector.extract_strided_slice %11 {offsets = [0, 16], sizes = [8, 8], strides = [1, 1]} : vector<8x32xbf16> to vector<8x8xbf16>
    %39 = vector.extract_strided_slice %15 {offsets = [0, 16], sizes = [8, 8], strides = [1, 1]} : vector<8x32xbf16> to vector<8x8xbf16>
    %cst_15 = arith.constant dense<0.000000e+00> : vector<8x8xf32>
    %40 = tpu.matmul %38, %39, %cst_15 {dimension_numbers = #tpu.dot_dimension_numbers<[1], [1], [0], [0], [0, 0, 1, 0], [], []>} : vector<8x8xbf16>, vector<8x8xbf16>, vector<8x8xf32> -> vector<8x8xf32>
    %41 = vector.extract_strided_slice %16 {offsets = [2, 0], sizes = [1, 8], strides = [1, 1]} : vector<4x8xf32> to vector<1x8xf32>
    %42 = vector.broadcast %41 : vector<1x8xf32> to vector<8x8xf32>
    %43 = arith.addf %40, %42 : vector<8x8xf32>
    %44 = vector.extract_strided_slice %12 {offsets = [0, 24], sizes = [8, 8], strides = [1, 1]} : vector<8x32xbf16> to vector<8x8xbf16>
    %45 = vector.extract_strided_slice %13 {offsets = [0, 24], sizes = [8, 8], strides = [1, 1]} : vector<8x32xbf16> to vector<8x8xbf16>
    %cst_16 = arith.constant dense<0.000000e+00> : vector<8x8xf32>
    %46 = tpu.matmul %44, %45, %cst_16 {dimension_numbers = #tpu.dot_dimension_numbers<[1], [1], [0], [0], [0, 0, 1, 0], [], []>} : vector<8x8xbf16>, vector<8x8xbf16>, vector<8x8xf32> -> vector<8x8xf32>
    %47 = vector.extract_strided_slice %11 {offsets = [0, 24], sizes = [8, 8], strides = [1, 1]} : vector<8x32xbf16> to vector<8x8xbf16>
    %48 = vector.extract_strided_slice %15 {offsets = [0, 24], sizes = [8, 8], strides = [1, 1]} : vector<8x32xbf16> to vector<8x8xbf16>
    %cst_17 = arith.constant dense<0.000000e+00> : vector<8x8xf32>
    %49 = tpu.matmul %47, %48, %cst_17 {dimension_numbers = #tpu.dot_dimension_numbers<[1], [1], [0], [0], [0, 0, 1, 0], [], []>} : vector<8x8xbf16>, vector<8x8xbf16>, vector<8x8xf32> -> vector<8x8xf32>
    %50 = vector.extract_strided_slice %16 {offsets = [3, 0], sizes = [1, 8], strides = [1, 1]} : vector<4x8xf32> to vector<1x8xf32>
    %51 = vector.broadcast %50 : vector<1x8xf32> to vector<8x8xf32>
    %52 = arith.addf %49, %51 : vector<8x8xf32>
    %53 = tpu.concatenate %19, %28, %37, %46 in 0 : vector<8x8xf32>, vector<8x8xf32>, vector<8x8xf32>, vector<8x8xf32> -> vector<32x8xf32>
    %54 = tpu.concatenate %25, %34, %43, %52 in 0 : vector<8x8xf32>, vector<8x8xf32>, vector<8x8xf32>, vector<8x8xf32> -> vector<32x8xf32>
    %55 = vector.extract_strided_slice %54 {offsets = [1, 0], sizes = [31, 8], strides = [1, 1]} : vector<32x8xf32> to vector<31x8xf32>
    %cst_18 = arith.constant 0.000000e+00 : f32
    %56 = vector.broadcast %cst_18 : f32 to vector<1x8xf32>
    %57 = tpu.concatenate %55, %56 in 0 : vector<31x8xf32>, vector<1x8xf32> -> vector<32x8xf32>
    %cst_19 = arith.constant 0.000000e+00 : f32
    %58 = vector.broadcast %cst_19 : f32 to vector<32x1xf32>
    %cst_20 = arith.constant 0.000000e+00 : f32
    %59 = vector.broadcast %cst_20 : f32 to vector<32x111xf32>
    %60 = tpu.concatenate %54, %58, %57, %59 in 1 : vector<32x8xf32>, vector<32x1xf32>, vector<32x8xf32>, vector<32x111xf32> -> vector<32x128xf32>
    %61 = tpu.iota {dimensions = array<i32: 0>} : vector<32x1xi32>
    %c8_i32 = arith.constant 8 : i32
    %c0_i32 = arith.constant 0 : i32
    %62 = arith.cmpi eq, %c8_i32, %c0_i32 : i32
    %c1_i32 = arith.constant 1 : i32
    %63 = arith.select %62, %c1_i32, %c8_i32 : i32
    %64 = vector.broadcast %63 : i32 to vector<32x1xi32>
    %65 = arith.remsi %61, %64 : vector<32x1xi32>
    %c0_i32_21 = arith.constant 0 : i32
    %66 = vector.broadcast %c0_i32_21 : i32 to vector<32x1xi32>
    %67 = arith.cmpi ne, %65, %66 : vector<32x1xi32>
    %c0_i32_22 = arith.constant 0 : i32
    %68 = vector.broadcast %c0_i32_22 : i32 to vector<32x1xi32>
    %69 = arith.cmpi slt, %65, %68 : vector<32x1xi32>
    %c0_i32_23 = arith.constant 0 : i32
    %70 = arith.cmpi slt, %63, %c0_i32_23 : i32
    %71 = vector.broadcast %70 : i1 to vector<32x1xi1>
    %72 = vector.broadcast %71 : vector<32x1xi1> to vector<32x1xi1>
    %73 = arith.xori %69, %72 : vector<32x1xi1>
    %74 = arith.andi %73, %67 : vector<32x1xi1>
    %75 = vector.broadcast %63 : i32 to vector<32x1xi32>
    %76 = arith.addi %65, %75 : vector<32x1xi32>
    %77 = arith.select %74, %76, %65 : vector<32x1xi1>, vector<32x1xi32>
    %c7_i32 = arith.constant 7 : i32
    %78 = vector.broadcast %c7_i32 : i32 to vector<32x1xi32>
    %79 = arith.subi %78, %77 : vector<32x1xi32>
    %c127_i32 = arith.constant 127 : i32
    %80 = tpu.dynamic_rotate %60 by %c127_i32 dim 1 : vector<32x128xf32>, i32 -> vector<32x128xf32>
    %c1_i32_24 = arith.constant 1 : i32
    %81 = vector.broadcast %c1_i32_24 : i32 to vector<32x1xi32>
    %82 = arith.andi %79, %81 : vector<32x1xi32>
    %c0_i32_25 = arith.constant 0 : i32
    %83 = vector.broadcast %c0_i32_25 : i32 to vector<32x1xi32>
    %84 = arith.cmpi ne, %82, %83 : vector<32x1xi32>
    %85 = vector.shape_cast %84 : vector<32x1xi1> to vector<32x1xi1>
    %86 = vector.broadcast %85 : vector<32x1xi1> to vector<32x128xi1>
    %87 = arith.select %86, %80, %60 : vector<32x128xi1>, vector<32x128xf32>
    %c126_i32 = arith.constant 126 : i32
    %88 = tpu.dynamic_rotate %87 by %c126_i32 dim 1 : vector<32x128xf32>, i32 -> vector<32x128xf32>
    %c2_i32 = arith.constant 2 : i32
    %89 = vector.broadcast %c2_i32 : i32 to vector<32x1xi32>
    %90 = arith.andi %79, %89 : vector<32x1xi32>
    %c0_i32_26 = arith.constant 0 : i32
    %91 = vector.broadcast %c0_i32_26 : i32 to vector<32x1xi32>
    %92 = arith.cmpi ne, %90, %91 : vector<32x1xi32>
    %93 = vector.shape_cast %92 : vector<32x1xi1> to vector<32x1xi1>
    %94 = vector.broadcast %93 : vector<32x1xi1> to vector<32x128xi1>
    %95 = arith.select %94, %88, %87 : vector<32x128xi1>, vector<32x128xf32>
    %c124_i32 = arith.constant 124 : i32
    %96 = tpu.dynamic_rotate %95 by %c124_i32 dim 1 : vector<32x128xf32>, i32 -> vector<32x128xf32>
    %c4_i32 = arith.constant 4 : i32
    %97 = vector.broadcast %c4_i32 : i32 to vector<32x1xi32>
    %98 = arith.andi %79, %97 : vector<32x1xi32>
    %c0_i32_27 = arith.constant 0 : i32
    %99 = vector.broadcast %c0_i32_27 : i32 to vector<32x1xi32>
    %100 = arith.cmpi ne, %98, %99 : vector<32x1xi32>
    %101 = vector.shape_cast %100 : vector<32x1xi1> to vector<32x1xi1>
    %102 = vector.broadcast %101 : vector<32x1xi1> to vector<32x128xi1>
    %103 = arith.select %102, %96, %95 : vector<32x128xi1>, vector<32x128xf32>
    %104 = vector.extract_strided_slice %103 {offsets = [0, 0], sizes = [32, 8], strides = [1, 1]} : vector<32x128xf32> to vector<32x8xf32>
    %105 = arith.addf %53, %104 : vector<32x8xf32>
    %cst_28 = arith.constant 0.353553385 : f32
    %106 = vector.broadcast %cst_28 : f32 to vector<32x8xf32>
    %107 = arith.mulf %105, %106 : vector<32x8xf32>
    %cst_29 = arith.constant dense<0xFF800000> : vector<32xf32>
    %108 = vector.multi_reduction <maximumf>, %107, %cst_29 [1] : vector<32x8xf32> to vector<32xf32>
    %109 = vector.shape_cast %108 : vector<32xf32> to vector<32x1xf32>
    %110 = vector.broadcast %109 : vector<32x1xf32> to vector<32x8xf32>
    %111 = arith.subf %107, %110 : vector<32x8xf32>
    %112 = math.exp %111 : vector<32x8xf32>
    %cst_30 = arith.constant dense<0.000000e+00> : vector<32xf32>
    %113 = vector.multi_reduction <add>, %112, %cst_30 [1] : vector<32x8xf32> to vector<32xf32>
    %114 = vector.shape_cast %113 : vector<32xf32> to vector<32x1xf32>
    %115 = tpu.reciprocal %114 {approx = true} : vector<32x1xf32> -> vector<32x1xf32>
    %116 = vector.broadcast %115 : vector<32x1xf32> to vector<32x8xf32>
    %117 = arith.mulf %112, %116 : vector<32x8xf32>
    %118 = arith.truncf %117 : vector<32x8xf32> to vector<32x8xbf16>
    %c0_31 = arith.constant 0 : index
    %c0_32 = arith.constant 0 : index
    %c0_33 = arith.constant 0 : index
    %119 = vector.load %arg3[%c0_31, %c0_32, %c0_33] : memref<4x8x32xbf16, #tpu.memory_space<vmem>>, vector<4x8x32xbf16>
    %cst_34 = arith.constant 0.000000e+00 : f32
    %120 = vector.broadcast %cst_34 : f32 to vector<8x32xf32>
    %121 = vector.extract_strided_slice %118 {offsets = [0, 0], sizes = [8, 8], strides = [1, 1]} : vector<32x8xbf16> to vector<8x8xbf16>
    %122 = vector.extract_strided_slice %14 {offsets = [0, 0], sizes = [8, 8], strides = [1, 1]} : vector<8x32xbf16> to vector<8x8xbf16>
    %cst_35 = arith.constant dense<0.000000e+00> : vector<8x8xf32>
    %123 = tpu.matmul %121, %122, %cst_35 {dimension_numbers = #tpu.dot_dimension_numbers<[1], [0], [0], [1], [0, 0, 1, 1], [], []>} : vector<8x8xbf16>, vector<8x8xbf16>, vector<8x8xf32> -> vector<8x8xf32>
    %124 = arith.truncf %123 : vector<8x8xf32> to vector<8x8xbf16>
    %125 = vector.extract_strided_slice %119 {offsets = [0, 0, 0], sizes = [1, 8, 32], strides = [1, 1, 1]} : vector<4x8x32xbf16> to vector<1x8x32xbf16>
    %126 = vector.shape_cast %125 : vector<1x8x32xbf16> to vector<8x32xbf16>
    %cst_36 = arith.constant dense<0.000000e+00> : vector<8x32xf32>
    %127 = tpu.matmul %124, %126, %cst_36 {dimension_numbers = #tpu.dot_dimension_numbers<[1], [0], [0], [1], [0, 0, 1, 1], [], []>} : vector<8x8xbf16>, vector<8x32xbf16>, vector<8x32xf32> -> vector<8x32xf32>
    %128 = arith.addf %120, %127 : vector<8x32xf32>
    %129 = vector.extract_strided_slice %118 {offsets = [8, 0], sizes = [8, 8], strides = [1, 1]} : vector<32x8xbf16> to vector<8x8xbf16>
    %130 = vector.extract_strided_slice %14 {offsets = [0, 8], sizes = [8, 8], strides = [1, 1]} : vector<8x32xbf16> to vector<8x8xbf16>
    %cst_37 = arith.constant dense<0.000000e+00> : vector<8x8xf32>
    %131 = tpu.matmul %129, %130, %cst_37 {dimension_numbers = #tpu.dot_dimension_numbers<[1], [0], [0], [1], [0, 0, 1, 1], [], []>} : vector<8x8xbf16>, vector<8x8xbf16>, vector<8x8xf32> -> vector<8x8xf32>
    %132 = arith.truncf %131 : vector<8x8xf32> to vector<8x8xbf16>
    %133 = vector.extract_strided_slice %119 {offsets = [1, 0, 0], sizes = [1, 8, 32], strides = [1, 1, 1]} : vector<4x8x32xbf16> to vector<1x8x32xbf16>
    %134 = vector.shape_cast %133 : vector<1x8x32xbf16> to vector<8x32xbf16>
    %cst_38 = arith.constant dense<0.000000e+00> : vector<8x32xf32>
    %135 = tpu.matmul %132, %134, %cst_38 {dimension_numbers = #tpu.dot_dimension_numbers<[1], [0], [0], [1], [0, 0, 1, 1], [], []>} : vector<8x8xbf16>, vector<8x32xbf16>, vector<8x32xf32> -> vector<8x32xf32>
    %136 = arith.addf %128, %135 : vector<8x32xf32>
    %137 = vector.extract_strided_slice %118 {offsets = [16, 0], sizes = [8, 8], strides = [1, 1]} : vector<32x8xbf16> to vector<8x8xbf16>
    %138 = vector.extract_strided_slice %14 {offsets = [0, 16], sizes = [8, 8], strides = [1, 1]} : vector<8x32xbf16> to vector<8x8xbf16>
    %cst_39 = arith.constant dense<0.000000e+00> : vector<8x8xf32>
    %139 = tpu.matmul %137, %138, %cst_39 {dimension_numbers = #tpu.dot_dimension_numbers<[1], [0], [0], [1], [0, 0, 1, 1], [], []>} : vector<8x8xbf16>, vector<8x8xbf16>, vector<8x8xf32> -> vector<8x8xf32>
    %140 = arith.truncf %139 : vector<8x8xf32> to vector<8x8xbf16>
    %141 = vector.extract_strided_slice %119 {offsets = [2, 0, 0], sizes = [1, 8, 32], strides = [1, 1, 1]} : vector<4x8x32xbf16> to vector<1x8x32xbf16>
    %142 = vector.shape_cast %141 : vector<1x8x32xbf16> to vector<8x32xbf16>
    %cst_40 = arith.constant dense<0.000000e+00> : vector<8x32xf32>
    %143 = tpu.matmul %140, %142, %cst_40 {dimension_numbers = #tpu.dot_dimension_numbers<[1], [0], [0], [1], [0, 0, 1, 1], [], []>} : vector<8x8xbf16>, vector<8x32xbf16>, vector<8x32xf32> -> vector<8x32xf32>
    %144 = arith.addf %136, %143 : vector<8x32xf32>
    %145 = vector.extract_strided_slice %118 {offsets = [24, 0], sizes = [8, 8], strides = [1, 1]} : vector<32x8xbf16> to vector<8x8xbf16>
    %146 = vector.extract_strided_slice %14 {offsets = [0, 24], sizes = [8, 8], strides = [1, 1]} : vector<8x32xbf16> to vector<8x8xbf16>
    %cst_41 = arith.constant dense<0.000000e+00> : vector<8x8xf32>
    %147 = tpu.matmul %145, %146, %cst_41 {dimension_numbers = #tpu.dot_dimension_numbers<[1], [0], [0], [1], [0, 0, 1, 1], [], []>} : vector<8x8xbf16>, vector<8x8xbf16>, vector<8x8xf32> -> vector<8x8xf32>
    %148 = arith.truncf %147 : vector<8x8xf32> to vector<8x8xbf16>
    %149 = vector.extract_strided_slice %119 {offsets = [3, 0, 0], sizes = [1, 8, 32], strides = [1, 1, 1]} : vector<4x8x32xbf16> to vector<1x8x32xbf16>
    %150 = vector.shape_cast %149 : vector<1x8x32xbf16> to vector<8x32xbf16>
    %cst_42 = arith.constant dense<0.000000e+00> : vector<8x32xf32>
    %151 = tpu.matmul %148, %150, %cst_42 {dimension_numbers = #tpu.dot_dimension_numbers<[1], [0], [0], [1], [0, 0, 1, 1], [], []>} : vector<8x8xbf16>, vector<8x32xbf16>, vector<8x32xf32> -> vector<8x32xf32>
    %152 = arith.addf %144, %151 : vector<8x32xf32>
    %c0_43 = arith.constant 0 : index
    %c0_44 = arith.constant 0 : index
    %c0_45 = arith.constant 0 : index
    %153 = vector.load %arg7[%c0_43, %c0_44, %c0_45] : memref<1x8x32xf32, #tpu.memory_space<vmem>>, vector<1x8x32xf32>
    %154 = vector.shape_cast %153 : vector<1x8x32xf32> to vector<8x32xf32>
    %155 = vector.shape_cast %152 : vector<8x32xf32> to vector<1x8x32xf32>
    tpu.vector_store %arg7[%c0_43, %c0_44, %c0_45], %155 {strides = array<i32>} : memref<1x8x32xf32, #tpu.memory_space<vmem>>, vector<1x8x32xf32>,
    return
  }
  func.func @transform_0(%arg0: i32) -> (i32, i32, i32) {
    %c0_i32 = arith.constant 0 : i32
    %c0_i32_0 = arith.constant 0 : i32
    %c0_i32_1 = arith.constant 0 : i32
    return %arg0, %c0_i32, %c0_i32_0 : i32, i32, i32
  }
  func.func @transform_1(%arg0: i32) -> (i32, i32) {
    %c0_i32 = arith.constant 0 : i32
    %c0_i32_0 = arith.constant 0 : i32
    %c0_i32_1 = arith.constant 0 : i32
    return %c0_i32, %c0_i32_0 : i32, i32
  }
  func.func @transform_2(%arg0: i32) -> (i32, i32, i32) {
    %c0_i32 = arith.constant 0 : i32
    %c0_i32_0 = arith.constant 0 : i32
    %c0_i32_1 = arith.constant 0 : i32
    %c0_i32_2 = arith.constant 0 : i32
    return %c0_i32, %c0_i32_0, %c0_i32_1 : i32, i32, i32
  }
  func.func @transform_3(%arg0: i32) -> (i32, i32) {
    %c0_i32 = arith.constant 0 : i32
    %c0_i32_0 = arith.constant 0 : i32
    %c0_i32_1 = arith.constant 0 : i32
    return %c0_i32, %c0_i32_0 : i32, i32
  }
  func.func @transform_4(%arg0: i32) -> (i32, i32) {
    %c0_i32 = arith.constant 0 : i32
    %c0_i32_0 = arith.constant 0 : i32
    %c0_i32_1 = arith.constant 0 : i32
    return %c0_i32, %c0_i32_0 : i32, i32
  }
  func.func @transform_5(%arg0: i32) -> (i32, i32) {
    %c0_i32 = arith.constant 0 : i32
    %c0_i32_0 = arith.constant 0 : i32
    %c0_i32_1 = arith.constant 0 : i32
    return %c0_i32, %c0_i32_0 : i32, i32
  }
  func.func @transform_6(%arg0: i32) -> (i32, i32, i32) {
    %c0_i32 = arith.constant 0 : i32
    %c0_i32_0 = arith.constant 0 : i32
    %c0_i32_1 = arith.constant 0 : i32
    return %arg0, %c0_i32, %c0_i32_0 : i32, i32, i32
  }
}

</mosaic_0001>

<llo_original>
// kernel: tpu_custom_call.1
$region0: #{tpu_custom_call.1}
  #allocation0 [shape = 'u32[]', space=smem, size = 0x4, offset = 0x4, fixed_abs, tag = 'smem constant byte address 0x4 - core index']
  #allocation1 [shape = 'u32[144,128]{1,0:T(1,128)}', space=vmem, size = 0x12000, scoped, tag = 'internal scratch']
  %s0 = inlined_call_operand.hbm [shape: f32[2,8,32], index: 0, kind: input, shape index: {}]
  %s1 = inlined_call_operand.hbm [shape: bf16[32,96], index: 1, kind: input, shape index: {}]
  %s2 = inlined_call_operand.hbm [shape: bf16[4,8,32], index: 2, kind: input, shape index: {}]
  %s3 = inlined_call_operand.hbm [shape: bf16[8,32], index: 3, kind: input, shape index: {}]
  %s4 = inlined_call_operand.hbm [shape: f32[1,32], index: 4, kind: input, shape index: {}]
  %s5 = inlined_call_operand.hbm [shape: f32[4,8], index: 5, kind: input, shape index: {}]
  %s6 = inlined_call_operand.hbm [shape: f32[2,8,32], index: 6, kind: output, shape index: {}]
  %s7 = sld [smem:[#allocation0]]
  $region81: #{tpu_custom_call.1} parent=0
    _
  %s9 = ssub.s32 1, %s7
  %s10 = scalar_select 0, %s9, %s7
  $region1: #{tpu_custom_call.1} parent=0
    #allocation2 [shape = 'u8[8192]{0}', space=vmem, size = 0x2000, scoped, tag = 'input window, operand 0']
    #allocation3 [shape = 's32[2]{0}', space=sflag, size = 0x8, scoped, tag = 'scoped memory for tpu_custom_call.1']
    #allocation4 [shape = 's32[2]{0}', space=sflag, size = 0x8, scoped, tag = 'scoped memory for tpu_custom_call.1']
    #allocation5 [shape = 'u8[8192]{0}', space=vmem, size = 0x2000, scoped, tag = 'input window, operand 1, single buffered']
    #allocation6 [shape = 's32[1]{0}', space=sflag, size = 0x4, scoped, tag = 'scoped memory for tpu_custom_call.1']
    #allocation7 [shape = 'u8[8192]{0}', space=vmem, size = 0x2000, scoped, tag = 'input window, operand 2, single buffered']
    #allocation8 [shape = 'u8[2048]{0}', space=vmem, size = 0x800, scoped, tag = 'input window, operand 3, single buffered']
    #allocation9 [shape = 's32[1]{0}', space=sflag, size = 0x4, scoped, tag = 'scoped memory for tpu_custom_call.1']
    #allocation10 [shape = 'u8[512]{0}', space=vmem, size = 0x400, scoped, tag = 'input window, operand 4, single buffered']
    #allocation11 [shape = 'u8[2048]{0}', space=vmem, size = 0x800, scoped, tag = 'input window, operand 5, single buffered']
    #allocation12 [shape = 's32[1]{0}', space=sflag, size = 0x4, scoped, tag = 'scoped memory for tpu_custom_call.1']
    #allocation13 [shape = 'u8[8192]{0}', space=vmem, size = 0x2000, scoped, tag = 'output window, operand 0']
    %11 = vsyncpa [#allocation3], 0
    %s12 = scalar_lea.sflag [#allocation3], 1
    %13 = vsyncpa %s12, 0
    %14 = vsyncpa [#allocation6], 0
    %15 = vsyncpa [#allocation9], 0
    %16 = vsyncpa [#allocation12], 0
    %17 = vsyncpa [#allocation4], 0
    %s18 = scalar_lea.sflag [#allocation4], 1
    %19 = vsyncpa %s18, 0
    loop: start=0, step=1, limit=4
    $region2: #{tpu_custom_call.1} parent=1 // loop_pre_header
      _
    $region3: #{tpu_custom_call.1} parent=1 // loop_header
      %s21 = sphi 0, %s25
      %p22 = scmp.ge.s32.totalorder %s21, 4
      %s31 = sphi 0, %s33
      %s34 = sphi 0, %s31
      %s35 = sphi 0, %s34
      %s51 = sphi 0, %s35
      %s55 = sphi 0, %s55
      %s57 = sphi 0, %s55
      %s58 = sphi 0, %s57
      %s72 = sphi 0, %s58
      %s76 = sphi 0, %s76
      %s78 = sphi 0, %s76
      %s79 = sphi 0, %s78
      %s93 = sphi 0, %s79
      %s97 = sphi 0, %s97
      %s99 = sphi 0, %s97
      %s100 = sphi 0, %s99
      %s114 = sphi 0, %s100
      %s118 = sphi 0, %s118
      %s120 = sphi 0, %s118
      %s121 = sphi 0, %s120
      %s135 = sphi 0, %s121
      %s139 = sphi 0, %s139
      %s141 = sphi 0, %s139
      %s142 = sphi 0, %s141
      %s156 = sphi 0, %s142
      %s162 = sphi 0, %s164
      %s165 = sphi 0, %s162
      %s166 = sphi 0, %s165
      %s182 = sphi 0, %s166
    $region4: #{tpu_custom_call.1} parent=1 // loop_header_branch
      %24 = sbr.rel (%p22) target = $region8
    $region5: #{tpu_custom_call.1} parent=1 // loop_body
      %s26 = ssub.s32 %s21, 1
      %s27 = ssub.s32 %s21, 2
      %s28 = sadd.s32 %s21, 1
      %s29 = ssub.s32 %s21, %s28
      %p30 = scmp.eq.s32.totalorder %s29, 0
      %s32 = sadd.s32 %s31, 1
      %s33 = scalar_select %p30, %s31, %s32
      %p36 = pneg %p30
      %p37 = scmp.eq.s32.totalorder %s21, 1
      %p38 = por %p36, %p37
      %p39 = scmp.ne.s32.totalorder %s31, %s34
      %p40 = scmp.eq.s32.totalorder %s21, 0
      %p41 = por %p39, %p40
      %p42 = scmp.ne.s32.totalorder %s31, %s34
      %p43 = scmp.eq.s32.totalorder %s26, 1
      %p44 = por %p42, %p43
      %p45 = scmp.ne.s32.totalorder %s34, %s35
      %p46 = scmp.eq.s32.totalorder %s26, 0
      %p47 = por %p45, %p46
      %p48 = scmp.ne.s32.totalorder %s34, %s35
      %p49 = scmp.eq.s32.totalorder %s27, 1
      %p50 = por %p48, %p49
      %p52 = scmp.ne.s32.totalorder %s35, %s51
      %p53 = scmp.eq.s32.totalorder %s27, 0
      %p54 = por %p52, %p53
      %s56 = sadd.s32 %s55, 1
      %p59 = scmp.eq.s32.totalorder %s21, 1
      %p60 = scmp.ne.s32.totalorder %s55, %s57
      %p61 = scmp.eq.s32.totalorder %s21, 0
      %p62 = por %p60, %p61
      %p63 = scmp.ne.s32.totalorder %s55, %s57
      %p64 = scmp.eq.s32.totalorder %s26, 1
      %p65 = por %p63, %p64
      %p66 = scmp.ne.s32.totalorder %s57, %s58
      %p67 = scmp.eq.s32.totalorder %s26, 0
      %p68 = por %p66, %p67
      %p69 = scmp.ne.s32.totalorder %s57, %s58
      %p70 = scmp.eq.s32.totalorder %s27, 1
      %p71 = por %p69, %p70
      %p73 = scmp.ne.s32.totalorder %s58, %s72
      %p74 = scmp.eq.s32.totalorder %s27, 0
      %p75 = por %p73, %p74
      %s77 = sadd.s32 %s76, 1
      %p80 = scmp.eq.s32.totalorder %s21, 1
      %p81 = scmp.ne.s32.totalorder %s76, %s78
      %p82 = scmp.eq.s32.totalorder %s21, 0
      %p83 = por %p81, %p82
      %p84 = scmp.ne.s32.totalorder %s76, %s78
      %p85 = scmp.eq.s32.totalorder %s26, 1
      %p86 = por %p84, %p85
      %p87 = scmp.ne.s32.totalorder %s78, %s79
      %p88 = scmp.eq.s32.totalorder %s26, 0
      %p89 = por %p87, %p88
      %p90 = scmp.ne.s32.totalorder %s78, %s79
      %p91 = scmp.eq.s32.totalorder %s27, 1
      %p92 = por %p90, %p91
      %p94 = scmp.ne.s32.totalorder %s79, %s93
      %p95 = scmp.eq.s32.totalorder %s27, 0
      %p96 = por %p94, %p95
      %s98 = sadd.s32 %s97, 1
      %p101 = scmp.eq.s32.totalorder %s21, 1
      %p102 = scmp.ne.s32.totalorder %s97, %s99
      %p103 = scmp.eq.s32.totalorder %s21, 0
      %p104 = por %p102, %p103
      %p105 = scmp.ne.s32.totalorder %s97, %s99
      %p106 = scmp.eq.s32.totalorder %s26, 1
      %p107 = por %p105, %p106
      %p108 = scmp.ne.s32.totalorder %s99, %s100
      %p109 = scmp.eq.s32.totalorder %s26, 0
      %p110 = por %p108, %p109
      %p111 = scmp.ne.s32.totalorder %s99, %s100
      %p112 = scmp.eq.s32.totalorder %s27, 1
      %p113 = por %p111, %p112
      %p115 = scmp.ne.s32.totalorder %s100, %s114
      %p116 = scmp.eq.s32.totalorder %s27, 0
      %p117 = por %p115, %p116
      %s119 = sadd.s32 %s118, 1
      %p122 = scmp.eq.s32.totalorder %s21, 1
      %p123 = scmp.ne.s32.totalorder %s118, %s120
      %p124 = scmp.eq.s32.totalorder %s21, 0
      %p125 = por %p123, %p124
      %p126 = scmp.ne.s32.totalorder %s118, %s120
      %p127 = scmp.eq.s32.totalorder %s26, 1
      %p128 = por %p126, %p127
      %p129 = scmp.ne.s32.totalorder %s120, %s121
      %p130 = scmp.eq.s32.totalorder %s26, 0
      %p131 = por %p129, %p130
      %p132 = scmp.ne.s32.totalorder %s120, %s121
      %p133 = scmp.eq.s32.totalorder %s27, 1
      %p134 = por %p132, %p133
      %p136 = scmp.ne.s32.totalorder %s121, %s135
      %p137 = scmp.eq.s32.totalorder %s27, 0
      %p138 = por %p136, %p137
      %s140 = sadd.s32 %s139, 1
      %p143 = scmp.eq.s32.totalorder %s21, 1
      %p144 = scmp.ne.s32.totalorder %s139, %s141
      %p145 = scmp.eq.s32.totalorder %s21, 0
      %p146 = por %p144, %p145
      %p147 = scmp.ne.s32.totalorder %s139, %s141
      %p148 = scmp.eq.s32.totalorder %s26, 1
      %p149 = por %p147, %p148
      %p150 = scmp.ne.s32.totalorder %s141, %s142
      %p151 = scmp.eq.s32.totalorder %s26, 0
      %p152 = por %p150, %p151
      %p153 = scmp.ne.s32.totalorder %s141, %s142
      %p154 = scmp.eq.s32.totalorder %s27, 1
      %p155 = por %p153, %p154
      %p157 = scmp.ne.s32.totalorder %s142, %s156
      %p158 = scmp.eq.s32.totalorder %s27, 0
      %p159 = por %p157, %p158
      %s160 = ssub.s32 %s21, %s28
      %p161 = scmp.eq.s32.totalorder %s160, 0
      %s163 = sadd.s32 %s162, 1
      %s164 = scalar_select %p161, %s162, %s163
      %p167 = pneg %p161
      %p168 = scmp.eq.s32.totalorder %s21, 1
      %p169 = por %p167, %p168
      %p170 = scmp.ne.s32.totalorder %s162, %s165
      %p171 = scmp.eq.s32.totalorder %s21, 0
      %p172 = por %p170, %p171
      %p173 = scmp.ne.s32.totalorder %s162, %s165
      %p174 = scmp.eq.s32.totalorder %s26, 1
      %p175 = por %p173, %p174
      %p176 = scmp.ne.s32.totalorder %s165, %s166
      %p177 = scmp.eq.s32.totalorder %s26, 0
      %p178 = por %p176, %p177
      %p179 = scmp.ne.s32.totalorder %s165, %s166
      %p180 = scmp.eq.s32.totalorder %s27, 1
      %p181 = por %p179, %p180
      %p183 = scmp.ne.s32.totalorder %s166, %s182
      %p184 = scmp.eq.s32.totalorder %s27, 0
      %p185 = por %p183, %p184
      %p186 = scmp.le.s32.totalorder 1, %s21
      %p187 = scmp.lt.s32.totalorder %s21, 3
      %p188 = pnand %p186, %p187
      %p189 = pneg %p188
      // Predicated region
      $region9: #{tpu_custom_call.1} parent=5 // pred_check
        _
      $region10: #{tpu_custom_call.1} parent=5 // pred_check_branch
        %191 = sbr.rel (%p188) target = $region12
      $region11: #{tpu_custom_call.1} parent=5 // pred_region
        %s192 = ssub.s32 %s21, 1
        // Predicated region
        $region13: #{tpu_custom_call.1} parent=11 // pred_check
          %p193 = pneg %p68
        $region14: #{tpu_custom_call.1} parent=11 // pred_check_branch
          %195 = sbr.rel (%p193) target = $region16
        $region15: #{tpu_custom_call.1} parent=11 // pred_region
          %s197 = ssub.s32 256, 256
          %198 = vsyncadd [#allocation6], %s197
          %s199 = sshll.u32 [#allocation5], 4
          %s200 = int_to_ptr.vmem [resolvable:$true] %s199
          %205 = dma.hbm_to_vmem [thread:$0]  %s1, 256, %s200, [#allocation6], 64, 64, 4
        $region16: #{tpu_custom_call.1} parent=11 // pred_fallthru
          _
        // Predicated region
        $region17: #{tpu_custom_call.1} parent=11 // pred_check
          %p206 = pneg %p89
        $region18: #{tpu_custom_call.1} parent=11 // pred_check_branch
          %208 = sbr.rel (%p206) target = $region20
        $region19: #{tpu_custom_call.1} parent=11 // pred_region
          %s210 = ssub.s32 256, 256
          %211 = vsyncadd [#allocation6], %s210
          %s212 = sshll.u32 [#allocation7], 4
          %s213 = int_to_ptr.vmem [resolvable:$true] %s212
          %218 = dma.hbm_to_vmem [thread:$0]  %s2, 256, %s213, [#allocation6], 64, 64, 4
        $region20: #{tpu_custom_call.1} parent=11 // pred_fallthru
          _
        // Predicated region
        $region21: #{tpu_custom_call.1} parent=11 // pred_check
          %p219 = pneg %p110
        $region22: #{tpu_custom_call.1} parent=11 // pred_check_branch
          %221 = sbr.rel (%p219) target = $region24
        $region23: #{tpu_custom_call.1} parent=11 // pred_region
          %s223 = ssub.s32 64, 64
          %224 = vsyncadd [#allocation9], %s223
          %s226 = sshll.u32 [#allocation8], 4
          %s227 = int_to_ptr.vmem [resolvable:$true] %s226
          %229 = dma.hbm_to_vmem [thread:$0]  %s3, 64, %s227, [#allocation9]
        $region24: #{tpu_custom_call.1} parent=11 // pred_fallthru
          _
        // Predicated region
        $region25: #{tpu_custom_call.1} parent=11 // pred_check
          %p230 = pneg %p131
        $region26: #{tpu_custom_call.1} parent=11 // pred_check_branch
          %232 = sbr.rel (%p230) target = $region28
        $region27: #{tpu_custom_call.1} parent=11 // pred_region
          %s234 = ssub.s32 16, 16
          %235 = vsyncadd [#allocation9], %s234
          %s237 = sshll.u32 [#allocation10], 4
          %s238 = int_to_ptr.vmem [resolvable:$true] %s237
          %240 = dma.hbm_to_vmem [thread:$0]  %s4, 16, %s238, [#allocation9]
        $region28: #{tpu_custom_call.1} parent=11 // pred_fallthru
          _
        // Predicated region
        $region29: #{tpu_custom_call.1} parent=11 // pred_check
          %p241 = pneg %p152
        $region30: #{tpu_custom_call.1} parent=11 // pred_check_branch
          %243 = sbr.rel (%p241) target = $region32
        $region31: #{tpu_custom_call.1} parent=11 // pred_region
          %s245 = ssub.s32 64, 64
          %246 = vsyncadd [#allocation12], %s245
          %s248 = sshll.u32 [#allocation11], 4
          %s249 = int_to_ptr.vmem [resolvable:$true] %s248
          %251 = dma.hbm_to_vmem [thread:$0]  %s5, 64, %s249, [#allocation12]
        $region32: #{tpu_custom_call.1} parent=11 // pred_fallthru
          _
      $region12: #{tpu_custom_call.1} parent=5 // pred_fallthru
        _
      %p252 = scmp.lt.s32.totalorder %s21, 2
      // Predicated region
      $region33: #{tpu_custom_call.1} parent=5 // pred_check
        %p253 = pneg %p252
      $region34: #{tpu_custom_call.1} parent=5 // pred_check_branch
        %255 = sbr.rel (%p253) target = $region36
      $region35: #{tpu_custom_call.1} parent=5 // pred_region
        // Predicated region
        $region37: #{tpu_custom_call.1} parent=35 // pred_check
          %p256 = pneg %p41
        $region38: #{tpu_custom_call.1} parent=35 // pred_check_branch
          %258 = sbr.rel (%p256) target = $region40
        $region39: #{tpu_custom_call.1} parent=35 // pred_region
          %s259 = sand.u32 %s31, 1
          %s260 = scalar_lea.sflag [#allocation3], %s259
          %s261 = sand.u32 %s31, 1
          %s262 = smul.addr %s261, 8
          %s263 = scalar_lea.vmem [#allocation2], %s262
          %s265 = ssub.s32 128, 128
          %266 = vsyncadd %s260, %s265
          %s267 = smul.addr %s21, 128
          %s268 = scalar_lea.hbm %s0, %s267
          %s270 = sshll.u32 %s263, 4
          %s271 = int_to_ptr.vmem [resolvable:$true] %s270
          %273 = dma.hbm_to_vmem [thread:$0]  %s268, 128, %s271, %s260
        $region40: #{tpu_custom_call.1} parent=35 // pred_fallthru
          _
      $region36: #{tpu_custom_call.1} parent=5 // pred_fallthru
        _
      %p274 = scmp.le.s32.totalorder 1, %s21
      %p275 = scmp.lt.s32.totalorder %s21, 3
      %p276 = pnand %p274, %p275
      %p277 = pneg %p276
      // Predicated region
      $region41: #{tpu_custom_call.1} parent=5 // pred_check
        _
      $region42: #{tpu_custom_call.1} parent=5 // pred_check_branch
        %279 = sbr.rel (%p276) target = $region44
      $region43: #{tpu_custom_call.1} parent=5 // pred_region
        %s280 = ssub.s32 %s21, 1
        %s281 = sand.u32 %s34, 1
        %s282 = scalar_lea.sflag [#allocation3], %s281
        %s283 = sand.u32 %s34, 1
        %s284 = smul.addr %s283, 8
        %s285 = scalar_lea.vmem [#allocation2], %s284
        // Predicated region
        $region45: #{tpu_custom_call.1} parent=43 // pred_check
          %p286 = pneg %p47
        $region46: #{tpu_custom_call.1} parent=43 // pred_check_branch
          %288 = sbr.rel (%p286) target = $region48
        $region47: #{tpu_custom_call.1} parent=43 // pred_region
          %289 = dma.done %s282, 128
        $region48: #{tpu_custom_call.1} parent=43 // pred_fallthru
          _
        // Predicated region
        $region49: #{tpu_custom_call.1} parent=43 // pred_check
          %p290 = pneg %p68
        $region50: #{tpu_custom_call.1} parent=43 // pred_check_branch
          %292 = sbr.rel (%p290) target = $region52
        $region51: #{tpu_custom_call.1} parent=43 // pred_region
          %293 = dma.done [#allocation6], 256
        $region52: #{tpu_custom_call.1} parent=43 // pred_fallthru
          _
        // Predicated region
        $region53: #{tpu_custom_call.1} parent=43 // pred_check
          %p294 = pneg %p89
        $region54: #{tpu_custom_call.1} parent=43 // pred_check_branch
          %296 = sbr.rel (%p294) target = $region56
        $region55: #{tpu_custom_call.1} parent=43 // pred_region
          %297 = dma.done [#allocation6], 256
        $region56: #{tpu_custom_call.1} parent=43 // pred_fallthru
          _
        // Predicated region
        $region57: #{tpu_custom_call.1} parent=43 // pred_check
          %p298 = pneg %p110
        $region58: #{tpu_custom_call.1} parent=43 // pred_check_branch
          %300 = sbr.rel (%p298) target = $region60
        $region59: #{tpu_custom_call.1} parent=43 // pred_region
          %301 = dma.done [#allocation9], 64
        $region60: #{tpu_custom_call.1} parent=43 // pred_fallthru
          _
        // Predicated region
        $region61: #{tpu_custom_call.1} parent=43 // pred_check
          %p302 = pneg %p131
        $region62: #{tpu_custom_call.1} parent=43 // pred_check_branch
          %304 = sbr.rel (%p302) target = $region64
        $region63: #{tpu_custom_call.1} parent=43 // pred_region
          %305 = dma.done [#allocation9], 16
        $region64: #{tpu_custom_call.1} parent=43 // pred_fallthru
          _
        // Predicated region
        $region65: #{tpu_custom_call.1} parent=43 // pred_check
          %p306 = pneg %p152
        $region66: #{tpu_custom_call.1} parent=43 // pred_check_branch
          %308 = sbr.rel (%p306) target = $region68
        $region67: #{tpu_custom_call.1} parent=43 // pred_region
          %309 = dma.done [#allocation12], 64
        $region68: #{tpu_custom_call.1} parent=43 // pred_fallthru
          _
        %s310 = sand.u32 %s34, 1
        %s311 = scalar_lea.sflag [#allocation3], %s310
        %s312 = sand.u32 %s34, 1
        %s313 = smul.addr %s312, 8
        %s314 = scalar_lea.vmem [#allocation2], %s313
        %p315 = pneg %p47
        %p316 = pneg %p44
        %p317 = pneg %p68
        %p318 = pneg %p65
        %p319 = pneg %p89
        %p320 = pneg %p86
        %p321 = pneg %p110
        %p322 = pneg %p107
        %p323 = pneg %p131
        %p324 = pneg %p128
        %p325 = pneg %p152
        %p326 = pneg %p149
        %p327 = pneg %p178
        %p328 = pneg %p175
        %s329 = sand.u32 %s165, 1
        %s330 = scalar_lea.sflag [#allocation4], %s329
        %s331 = sand.u32 %s165, 1
        %s332 = smul.addr %s331, 8
        %s333 = scalar_lea.vmem [#allocation13], %s332
        %v335 = vld [vmem:[%s285] sm:$0xff]
        %v336 = vpack.c.bf16 %v335, %v335
        %v337 = vld [vmem:[#allocation5] sm:$0xf]
        %v338 = vld [vmem:[#allocation5 + $0x4] sm:$0xf]
        %v339 = vld [vmem:[#allocation5 + $0x8] sm:$0xf]
        %v340 = vld [vmem:[#allocation5 + $0xc] sm:$0xf]
        %v345 = vunpack.c.l.b16 %v337
        %v346 = vunpack.c.l.b16 %v338
        %v347 = vunpack.c.l.b16 %v339
        %v348 = vunpack.c.l.b16 %v340
        %v349 = vpack.c.b16 %v346, %v345
        %v350 = vpack.c.b16 %v348, %v347
        %vm353 = vcmask 261120
        %v355 = vsel %vm353, %v336, 0
        %357 = vmatprep.subr.bf16.mxu0 0
        %358 = vmatpush1.bf16.msra.mxu0 %v349
        %359 = vmatprep.subr.bf16.mxu0 0
        %360 = vmatpush1.bf16.msra.mxu0 %v350
        %361 = vmatprep.subr.bf16.mxu0 0
        %362 = vmatpush1.bf16.msra.mxu0 0
        %363 = vmatprep.subr.bf16.mxu0 0
        %364 = vmatpush1.bf16.msra.mxu0 0
        %365 = vmatprep.subr.bf16.mxu0 0
        %366 = vmatpush1.bf16.msra.mxu0 0
        %367 = vmatprep.subr.bf16.mxu0 0
        %368 = vmatpush1.bf16.msra.mxu0 0
        %369 = vmatprep.subr.bf16.mxu0 0
        %370 = vmatpush1.bf16.msra.mxu0 0
        %371 = vmatprep.subr.bf16.mxu0 0
        %372 = vmatpush1.bf16.msra.mxu0 0
        %373 = vmatprep.subr.bf16.mxu0 0
        %374 = vmatpush1.bf16.msra.mxu0 0
        %375 = vmatprep.subr.bf16.mxu0 0
        %376 = vmatpush1.bf16.msra.mxu0 0
        %377 = vmatprep.subr.bf16.mxu0 0
        %378 = vmatpush1.bf16.msra.mxu0 0
        %379 = vmatprep.subr.bf16.mxu0 0
        %380 = vmatpush1.bf16.msra.mxu0 0
        %381 = vmatprep.subr.bf16.mxu0 0
        %382 = vmatpush1.bf16.msra.mxu0 0
        %383 = vmatprep.subr.bf16.mxu0 0
        %384 = vmatpush1.bf16.msra.mxu0 0
        %385 = vmatprep.subr.bf16.mxu0 0
        %386 = vmatpush1.bf16.msra.mxu0 0
        %387 = vmatprep.subr.bf16.mxu0 0
        %388 = vmatpush1.bf16.msra.mxu0 0
        %389 = vmatprep.mubr.bf16.mxu0 0
        %390 = vmatmul.mubr.bf16.gmra.mrb[0].mxu0 %v355
        %v391 = vpop.f32.mrb[0].mxu0
        %v392 = vadd.f32 0.0, %v391
        %v393 = vpop.f32.mrb[0].mxu0
        %v394 = vpop.f32.mrb[0].mxu0
        %v395 = vpop.f32.mrb[0].mxu0
        %396 = vdwg.mxu0
        %v397 = vld [vmem:[#allocation10] sm:$0x1]
        %v399 = vlaneseq
        %v400 = vshrl.u32 %v399, 7
        %v401 = vsub.s32 0, %v400
        %v402 = vrot.slane %v397, %v401
        %v404 = vadd.f32 %v392, %v402
        %v405 = vpack.c.bf16 %v392, %v392
        %v406 = vpack.c.bf16 %v404, %v404
        %v407 = vld [vmem:[#allocation8] sm:$0xf]
        %v408 = vld [vmem:[#allocation11] sm:$0xf]
        %410 = vrot.lane.b32.xlu0 %v405, 96
        %v411 = vpop.permute.xlu0 %410
        %vm412 = vcmask 64512
        %v414 = vsel %vm412, %v406, 0
        %v417 = vsel %vm412, %v411, 0
        %419 = vmatprep.subr.bf16.mxu0 0
        %420 = vmatpush1.bf16.xpose.msra.mxu0 %v417
        %421 = vmatprep.subr.bf16.mxu0 0
        %422 = vmatpush1.bf16.xpose.msra.mxu0 0
        %423 = vmatprep.subr.bf16.mxu0 0
        %424 = vmatpush1.bf16.xpose.msra.mxu0 0
        %425 = vmatprep.subr.bf16.mxu0 0
        %426 = vmatpush1.bf16.xpose.msra.mxu0 0
        %427 = vmatprep.subr.bf16.mxu0 0
        %428 = vmatpush1.bf16.xpose.msra.mxu0 0
        %429 = vmatprep.subr.bf16.mxu0 0
        %430 = vmatpush1.bf16.xpose.msra.mxu0 0
        %431 = vmatprep.subr.bf16.mxu0 0
        %432 = vmatpush1.bf16.xpose.msra.mxu0 0
        %433 = vmatprep.subr.bf16.mxu0 0
        %434 = vmatpush1.bf16.xpose.msra.mxu0 0
        %435 = vmatprep.subr.bf16.mxu0 0
        %436 = vmatpush1.bf16.xpose.msra.mxu0 0
        %437 = vmatprep.subr.bf16.mxu0 0
        %438 = vmatpush1.bf16.xpose.msra.mxu0 0
        %439 = vmatprep.subr.bf16.mxu0 0
        %440 = vmatpush1.bf16.xpose.msra.mxu0 0
        %441 = vmatprep.subr.bf16.mxu0 0
        %442 = vmatpush1.bf16.xpose.msra.mxu0 0
        %443 = vmatprep.subr.bf16.mxu0 0
        %444 = vmatpush1.bf16.xpose.msra.mxu0 0
        %445 = vmatprep.subr.bf16.mxu0 0
        %446 = vmatpush1.bf16.xpose.msra.mxu0 0
        %447 = vmatprep.subr.bf16.mxu0 0
        %448 = vmatpush1.bf16.xpose.msra.mxu0 0
        %449 = vmatprep.subr.bf16.mxu0 0
        %450 = vmatpush1.bf16.xpose.msra.mxu0 0
        %451 = vmatprep.mubr.bf16.mxu0 0
        %452 = vmatmul.mubr.bf16.gmra.mrb[0].mxu0 %v414
        %v453 = vpop.f32.mrb[0].mxu0
        %v454 = vadd.f32 0.0, %v453
        %v455 = vpop.f32.mrb[0].mxu0
        %v456 = vpop.f32.mrb[0].mxu0
        %v457 = vpop.f32.mrb[0].mxu0
        %458 = vdwg.mxu0
        %v459 = vlaneseq
        %v460 = vshrl.u32 %v459, 7
        %v461 = vsub.s32 0, %v460
        %v462 = vrot.slane %v408, %v461
        %v464 = vsel %vm412, %v405, 0
        %v467 = vsel %vm412, %v407, 0
        %469 = vmatprep.subr.bf16.mxu0 0
        %470 = vmatpush1.bf16.xpose.msra.mxu0 %v467
        %471 = vmatprep.subr.bf16.mxu0 0
        %472 = vmatpush1.bf16.xpose.msra.mxu0 0
        %473 = vmatprep.subr.bf16.mxu0 0
        %474 = vmatpush1.bf16.xpose.msra.mxu0 0
        %475 = vmatprep.subr.bf16.mxu0 0
        %476 = vmatpush1.bf16.xpose.msra.mxu0 0
        %477 = vmatprep.subr.bf16.mxu0 0
        %478 = vmatpush1.bf16.xpose.msra.mxu0 0
        %479 = vmatprep.subr.bf16.mxu0 0
        %480 = vmatpush1.bf16.xpose.msra.mxu0 0
        %481 = vmatprep.subr.bf16.mxu0 0
        %482 = vmatpush1.bf16.xpose.msra.mxu0 0
        %483 = vmatprep.subr.bf16.mxu0 0
        %484 = vmatpush1.bf16.xpose.msra.mxu0 0
        %485 = vmatprep.subr.bf16.mxu0 0
        %486 = vmatpush1.bf16.xpose.msra.mxu0 0
        %487 = vmatprep.subr.bf16.mxu0 0
        %488 = vmatpush1.bf16.xpose.msra.mxu0 0
        %489 = vmatprep.subr.bf16.mxu0 0
        %490 = vmatpush1.bf16.xpose.msra.mxu0 0
        %491 = vmatprep.subr.bf16.mxu0 0
        %492 = vmatpush1.bf16.xpose.msra.mxu0 0
        %493 = vmatprep.subr.bf16.mxu0 0
        %494 = vmatpush1.bf16.xpose.msra.mxu0 0
        %495 = vmatprep.subr.bf16.mxu0 0
        %496 = vmatpush1.bf16.xpose.msra.mxu0 0
        %497 = vmatprep.subr.bf16.mxu0 0
        %498 = vmatpush1.bf16.xpose.msra.mxu0 0
        %499 = vmatprep.subr.bf16.mxu0 0
        %500 = vmatpush1.bf16.xpose.msra.mxu0 0
        %501 = vmatprep.mubr.bf16.mxu0 0
        %502 = vmatmul.mubr.bf16.gmra.mrb[0].mxu0 %v464
        %v503 = vpop.f32.mrb[0].mxu0
        %v504 = vadd.f32 %v462, %v503
        %v505 = vpop.f32.mrb[0].mxu0
        %v506 = vpop.f32.mrb[0].mxu0
        %v507 = vpop.f32.mrb[0].mxu0
        %508 = vdwg.mxu0
        %510 = vrot.lane.b32.xlu0 %v406, 120
        %v511 = vpop.permute.xlu0 %510
        %512 = vrot.lane.b32.xlu0 %v405, 88
        %v513 = vpop.permute.xlu0 %512
        %v515 = vsel %vm412, %v511, 0
        %v518 = vsel %vm412, %v513, 0
        %520 = vmatprep.subr.bf16.mxu0 0
        %521 = vmatpush1.bf16.xpose.msra.mxu0 %v518
        %522 = vmatprep.subr.bf16.mxu0 0
        %523 = vmatpush1.bf16.xpose.msra.mxu0 0
        %524 = vmatprep.subr.bf16.mxu0 0
        %525 = vmatpush1.bf16.xpose.msra.mxu0 0
        %526 = vmatprep.subr.bf16.mxu0 0
        %527 = vmatpush1.bf16.xpose.msra.mxu0 0
        %528 = vmatprep.subr.bf16.mxu0 0
        %529 = vmatpush1.bf16.xpose.msra.mxu0 0
        %530 = vmatprep.subr.bf16.mxu0 0
        %531 = vmatpush1.bf16.xpose.msra.mxu0 0
        %532 = vmatprep.subr.bf16.mxu0 0
        %533 = vmatpush1.bf16.xpose.msra.mxu0 0
        %534 = vmatprep.subr.bf16.mxu0 0
        %535 = vmatpush1.bf16.xpose.msra.mxu0 0
        %536 = vmatprep.subr.bf16.mxu0 0
        %537 = vmatpush1.bf16.xpose.msra.mxu0 0
        %538 = vmatprep.subr.bf16.mxu0 0
        %539 = vmatpush1.bf16.xpose.msra.mxu0 0
        %540 = vmatprep.subr.bf16.mxu0 0
        %541 = vmatpush1.bf16.xpose.msra.mxu0 0
        %542 = vmatprep.subr.bf16.mxu0 0
        %543 = vmatpush1.bf16.xpose.msra.mxu0 0
        %544 = vmatprep.subr.bf16.mxu0 0
        %545 = vmatpush1.bf16.xpose.msra.mxu0 0
        %546 = vmatprep.subr.bf16.mxu0 0
        %547 = vmatpush1.bf16.xpose.msra.mxu0 0
        %548 = vmatprep.subr.bf16.mxu0 0
        %549 = vmatpush1.bf16.xpose.msra.mxu0 0
        %550 = vmatprep.subr.bf16.mxu0 0
        %551 = vmatpush1.bf16.xpose.msra.mxu0 0
        %552 = vmatprep.mubr.bf16.mxu0 0
        %553 = vmatmul.mubr.bf16.gmra.mrb[0].mxu0 %v515
        %v554 = vpop.f32.mrb[0].mxu0
        %v555 = vadd.f32 0.0, %v554
        %v556 = vpop.f32.mrb[0].mxu0
        %v557 = vpop.f32.mrb[0].mxu0
        %v558 = vpop.f32.mrb[0].mxu0
        %559 = vdwg.mxu0
        %v560 = vlaneseq
        %v561 = vshrl.u32 %v560, 7
        %v562 = vsub.s32 1, %v561
        %v563 = vrot.slane %v408, %v562
        %564 = vrot.lane.b32.xlu0 %v405, 120
        %v565 = vpop.permute.xlu0 %564
        %v567 = vunpack.c.l.b16 %v407
        %v568 = vpack.c.b16 %v567, %v567
        %569 = vrot.lane.b32.xlu0 %v568, 120
        %v570 = vpop.permute.xlu0 %569
        %v572 = vsel %vm412, %v565, 0
        %v575 = vsel %vm412, %v570, 0
        %577 = vmatprep.subr.bf16.mxu0 0
        %578 = vmatpush1.bf16.xpose.msra.mxu0 %v575
        %579 = vmatprep.subr.bf16.mxu0 0
        %580 = vmatpush1.bf16.xpose.msra.mxu0 0
        %581 = vmatprep.subr.bf16.mxu0 0
        %582 = vmatpush1.bf16.xpose.msra.mxu0 0
        %583 = vmatprep.subr.bf16.mxu0 0
        %584 = vmatpush1.bf16.xpose.msra.mxu0 0
        %585 = vmatprep.subr.bf16.mxu0 0
        %586 = vmatpush1.bf16.xpose.msra.mxu0 0
        %587 = vmatprep.subr.bf16.mxu0 0
        %588 = vmatpush1.bf16.xpose.msra.mxu0 0
        %589 = vmatprep.subr.bf16.mxu0 0
        %590 = vmatpush1.bf16.xpose.msra.mxu0 0
        %591 = vmatprep.subr.bf16.mxu0 0
        %592 = vmatpush1.bf16.xpose.msra.mxu0 0
        %593 = vmatprep.subr.bf16.mxu0 0
        %594 = vmatpush1.bf16.xpose.msra.mxu0 0
        %595 = vmatprep.subr.bf16.mxu0 0
        %596 = vmatpush1.bf16.xpose.msra.mxu0 0
        %597 = vmatprep.subr.bf16.mxu0 0
        %598 = vmatpush1.bf16.xpose.msra.mxu0 0
        %599 = vmatprep.subr.bf16.mxu0 0
        %600 = vmatpush1.bf16.xpose.msra.mxu0 0
        %601 = vmatprep.subr.bf16.mxu0 0
        %602 = vmatpush1.bf16.xpose.msra.mxu0 0
        %603 = vmatprep.subr.bf16.mxu0 0
        %604 = vmatpush1.bf16.xpose.msra.mxu0 0
        %605 = vmatprep.subr.bf16.mxu0 0
        %606 = vmatpush1.bf16.xpose.msra.mxu0 0
        %607 = vmatprep.subr.bf16.mxu0 0
        %608 = vmatpush1.bf16.xpose.msra.mxu0 0
        %609 = vmatprep.mubr.bf16.mxu0 0
        %610 = vmatmul.mubr.bf16.gmra.mrb[0].mxu0 %v572
        %v611 = vpop.f32.mrb[0].mxu0
        %v612 = vadd.f32 %v563, %v611
        %v613 = vpop.f32.mrb[0].mxu0
        %v614 = vpop.f32.mrb[0].mxu0
        %v615 = vpop.f32.mrb[0].mxu0
        %616 = vdwg.mxu0
        %617 = vrot.lane.b32.xlu0 %v406, 112
        %v618 = vpop.permute.xlu0 %617
        %619 = vrot.lane.b32.xlu0 %v405, 80
        %v620 = vpop.permute.xlu0 %619
        %v622 = vsel %vm412, %v618, 0
        %v625 = vsel %vm412, %v620, 0
        %627 = vmatprep.subr.bf16.mxu0 0
        %628 = vmatpush1.bf16.xpose.msra.mxu0 %v625
        %629 = vmatprep.subr.bf16.mxu0 0
        %630 = vmatpush1.bf16.xpose.msra.mxu0 0
        %631 = vmatprep.subr.bf16.mxu0 0
        %632 = vmatpush1.bf16.xpose.msra.mxu0 0
        %633 = vmatprep.subr.bf16.mxu0 0
        %634 = vmatpush1.bf16.xpose.msra.mxu0 0
        %635 = vmatprep.subr.bf16.mxu0 0
        %636 = vmatpush1.bf16.xpose.msra.mxu0 0
        %637 = vmatprep.subr.bf16.mxu0 0
        %638 = vmatpush1.bf16.xpose.msra.mxu0 0
        %639 = vmatprep.subr.bf16.mxu0 0
        %640 = vmatpush1.bf16.xpose.msra.mxu0 0
        %641 = vmatprep.subr.bf16.mxu0 0
        %642 = vmatpush1.bf16.xpose.msra.mxu0 0
        %643 = vmatprep.subr.bf16.mxu0 0
        %644 = vmatpush1.bf16.xpose.msra.mxu0 0
        %645 = vmatprep.subr.bf16.mxu0 0
        %646 = vmatpush1.bf16.xpose.msra.mxu0 0
        %647 = vmatprep.subr.bf16.mxu0 0
        %648 = vmatpush1.bf16.xpose.msra.mxu0 0
        %649 = vmatprep.subr.bf16.mxu0 0
        %650 = vmatpush1.bf16.xpose.msra.mxu0 0
        %651 = vmatprep.subr.bf16.mxu0 0
        %652 = vmatpush1.bf16.xpose.msra.mxu0 0
        %653 = vmatprep.subr.bf16.mxu0 0
        %654 = vmatpush1.bf16.xpose.msra.mxu0 0
        %655 = vmatprep.subr.bf16.mxu0 0
        %656 = vmatpush1.bf16.xpose.msra.mxu0 0
        %657 = vmatprep.subr.bf16.mxu0 0
        %658 = vmatpush1.bf16.xpose.msra.mxu0 0
        %659 = vmatprep.mubr.bf16.mxu0 0
        %660 = vmatmul.mubr.bf16.gmra.mrb[0].mxu0 %v622
        %v661 = vpop.f32.mrb[0].mxu0
        %v662 = vadd.f32 0.0, %v661
        %v663 = vpop.f32.mrb[0].mxu0
        %v664 = vpop.f32.mrb[0].mxu0
        %v665 = vpop.f32.mrb[0].mxu0
        %666 = vdwg.mxu0
        %v667 = vlaneseq
        %v668 = vshrl.u32 %v667, 7
        %v669 = vsub.s32 2, %v668
        %v670 = vrot.slane %v408, %v669
        %671 = vrot.lane.b32.xlu0 %v405, 112
        %v672 = vpop.permute.xlu0 %671
        %673 = vrot.lane.b32.xlu0 %v568, 112
        %v674 = vpop.permute.xlu0 %673
        %v676 = vsel %vm412, %v672, 0
        %v679 = vsel %vm412, %v674, 0
        %681 = vmatprep.subr.bf16.mxu0 0
        %682 = vmatpush1.bf16.xpose.msra.mxu0 %v679
        %683 = vmatprep.subr.bf16.mxu0 0
        %684 = vmatpush1.bf16.xpose.msra.mxu0 0
        %685 = vmatprep.subr.bf16.mxu0 0
        %686 = vmatpush1.bf16.xpose.msra.mxu0 0
        %687 = vmatprep.subr.bf16.mxu0 0
        %688 = vmatpush1.bf16.xpose.msra.mxu0 0
        %689 = vmatprep.subr.bf16.mxu0 0
        %690 = vmatpush1.bf16.xpose.msra.mxu0 0
        %691 = vmatprep.subr.bf16.mxu0 0
        %692 = vmatpush1.bf16.xpose.msra.mxu0 0
        %693 = vmatprep.subr.bf16.mxu0 0
        %694 = vmatpush1.bf16.xpose.msra.mxu0 0
        %695 = vmatprep.subr.bf16.mxu0 0
        %696 = vmatpush1.bf16.xpose.msra.mxu0 0
        %697 = vmatprep.subr.bf16.mxu0 0
        %698 = vmatpush1.bf16.xpose.msra.mxu0 0
        %699 = vmatprep.subr.bf16.mxu0 0
        %700 = vmatpush1.bf16.xpose.msra.mxu0 0
        %701 = vmatprep.subr.bf16.mxu0 0
        %702 = vmatpush1.bf16.xpose.msra.mxu0 0
        %703 = vmatprep.subr.bf16.mxu0 0
        %704 = vmatpush1.bf16.xpose.msra.mxu0 0
        %705 = vmatprep.subr.bf16.mxu0 0
        %706 = vmatpush1.bf16.xpose.msra.mxu0 0
        %707 = vmatprep.subr.bf16.mxu0 0
        %708 = vmatpush1.bf16.xpose.msra.mxu0 0
        %709 = vmatprep.subr.bf16.mxu0 0
        %710 = vmatpush1.bf16.xpose.msra.mxu0 0
        %711 = vmatprep.subr.bf16.mxu0 0
        %712 = vmatpush1.bf16.xpose.msra.mxu0 0
        %713 = vmatprep.mubr.bf16.mxu0 0
        %714 = vmatmul.mubr.bf16.gmra.mrb[0].mxu0 %v676
        %v715 = vpop.f32.mrb[0].mxu0
        %v716 = vadd.f32 %v670, %v715
        %v717 = vpop.f32.mrb[0].mxu0
        %v718 = vpop.f32.mrb[0].mxu0
        %v719 = vpop.f32.mrb[0].mxu0
        %720 = vdwg.mxu0
        %721 = vrot.lane.b32.xlu0 %v406, 104
        %v722 = vpop.permute.xlu0 %721
        %723 = vrot.lane.b32.xlu0 %v405, 72
        %v724 = vpop.permute.xlu0 %723
        %v726 = vsel %vm412, %v722, 0
        %v729 = vsel %vm412, %v724, 0
        %731 = vmatprep.subr.bf16.mxu0 0
        %732 = vmatpush1.bf16.xpose.msra.mxu0 %v729
        %733 = vmatprep.subr.bf16.mxu0 0
        %734 = vmatpush1.bf16.xpose.msra.mxu0 0
        %735 = vmatprep.subr.bf16.mxu0 0
        %736 = vmatpush1.bf16.xpose.msra.mxu0 0
        %737 = vmatprep.subr.bf16.mxu0 0
        %738 = vmatpush1.bf16.xpose.msra.mxu0 0
        %739 = vmatprep.subr.bf16.mxu0 0
        %740 = vmatpush1.bf16.xpose.msra.mxu0 0
        %741 = vmatprep.subr.bf16.mxu0 0
        %742 = vmatpush1.bf16.xpose.msra.mxu0 0
        %743 = vmatprep.subr.bf16.mxu0 0
        %744 = vmatpush1.bf16.xpose.msra.mxu0 0
        %745 = vmatprep.subr.bf16.mxu0 0
        %746 = vmatpush1.bf16.xpose.msra.mxu0 0
        %747 = vmatprep.subr.bf16.mxu0 0
        %748 = vmatpush1.bf16.xpose.msra.mxu0 0
        %749 = vmatprep.subr.bf16.mxu0 0
        %750 = vmatpush1.bf16.xpose.msra.mxu0 0
        %751 = vmatprep.subr.bf16.mxu0 0
        %752 = vmatpush1.bf16.xpose.msra.mxu0 0
        %753 = vmatprep.subr.bf16.mxu0 0
        %754 = vmatpush1.bf16.xpose.msra.mxu0 0
        %755 = vmatprep.subr.bf16.mxu0 0
        %756 = vmatpush1.bf16.xpose.msra.mxu0 0
        %757 = vmatprep.subr.bf16.mxu0 0
        %758 = vmatpush1.bf16.xpose.msra.mxu0 0
        %759 = vmatprep.subr.bf16.mxu0 0
        %760 = vmatpush1.bf16.xpose.msra.mxu0 0
        %761 = vmatprep.subr.bf16.mxu0 0
        %762 = vmatpush1.bf16.xpose.msra.mxu0 0
        %763 = vmatprep.mubr.bf16.mxu0 0
        %764 = vmatmul.mubr.bf16.gmra.mrb[0].mxu0 %v726
        %v765 = vpop.f32.mrb[0].mxu0
        %v766 = vadd.f32 0.0, %v765
        %v767 = vpop.f32.mrb[0].mxu0
        %v768 = vpop.f32.mrb[0].mxu0
        %v769 = vpop.f32.mrb[0].mxu0
        %770 = vdwg.mxu0
        %v771 = vlaneseq
        %v772 = vshrl.u32 %v771, 7
        %v773 = vsub.s32 3, %v772
        %v774 = vrot.slane %v408, %v773
        %775 = vrot.lane.b32.xlu0 %v405, 104
        %v776 = vpop.permute.xlu0 %775
        %777 = vrot.lane.b32.xlu0 %v568, 104
        %v778 = vpop.permute.xlu0 %777
        %v780 = vsel %vm412, %v776, 0
        %v783 = vsel %vm412, %v778, 0
        %785 = vmatprep.subr.bf16.mxu0 0
        %786 = vmatpush1.bf16.xpose.msra.mxu0 %v783
        %787 = vmatprep.subr.bf16.mxu0 0
        %788 = vmatpush1.bf16.xpose.msra.mxu0 0
        %789 = vmatprep.subr.bf16.mxu0 0
        %790 = vmatpush1.bf16.xpose.msra.mxu0 0
        %791 = vmatprep.subr.bf16.mxu0 0
        %792 = vmatpush1.bf16.xpose.msra.mxu0 0
        %793 = vmatprep.subr.bf16.mxu0 0
        %794 = vmatpush1.bf16.xpose.msra.mxu0 0
        %795 = vmatprep.subr.bf16.mxu0 0
        %796 = vmatpush1.bf16.xpose.msra.mxu0 0
        %797 = vmatprep.subr.bf16.mxu0 0
        %798 = vmatpush1.bf16.xpose.msra.mxu0 0
        %799 = vmatprep.subr.bf16.mxu0 0
        %800 = vmatpush1.bf16.xpose.msra.mxu0 0
        %801 = vmatprep.subr.bf16.mxu0 0
        %802 = vmatpush1.bf16.xpose.msra.mxu0 0
        %803 = vmatprep.subr.bf16.mxu0 0
        %804 = vmatpush1.bf16.xpose.msra.mxu0 0
        %805 = vmatprep.subr.bf16.mxu0 0
        %806 = vmatpush1.bf16.xpose.msra.mxu0 0
        %807 = vmatprep.subr.bf16.mxu0 0
        %808 = vmatpush1.bf16.xpose.msra.mxu0 0
        %809 = vmatprep.subr.bf16.mxu0 0
        %810 = vmatpush1.bf16.xpose.msra.mxu0 0
        %811 = vmatprep.subr.bf16.mxu0 0
        %812 = vmatpush1.bf16.xpose.msra.mxu0 0
        %813 = vmatprep.subr.bf16.mxu0 0
        %814 = vmatpush1.bf16.xpose.msra.mxu0 0
        %815 = vmatprep.subr.bf16.mxu0 0
        %816 = vmatpush1.bf16.xpose.msra.mxu0 0
        %817 = vmatprep.mubr.bf16.mxu0 0
        %818 = vmatmul.mubr.bf16.gmra.mrb[0].mxu0 %v780
        %v819 = vpop.f32.mrb[0].mxu0
        %v820 = vadd.f32 %v774, %v819
        %v821 = vpop.f32.mrb[0].mxu0
        %v822 = vpop.f32.mrb[0].mxu0
        %v823 = vpop.f32.mrb[0].mxu0
        %824 = vdwg.mxu0
        %vm829 = vcmask 1046528
        %v830 = vrot.slane %v504, 1
        %v831 = vrot.slane %v612, 1
        %v832 = vsel %vm829, %v830, %v831
        %v833 = vrot.slane %v716, 1
        %v834 = vsel %vm829, %v831, %v833
        %v835 = vrot.slane %v820, 1
        %v836 = vsel %vm829, %v833, %v835
        %v838 = vsel %vm829, %v835, 0.0
        %840 = vrot.lane.b32.xlu0 %v832, 9
        %v841 = vpop.permute.xlu0 %840
        %842 = vrot.lane.b32.xlu0 %v834, 9
        %v843 = vpop.permute.xlu0 %842
        %844 = vrot.lane.b32.xlu0 %v836, 9
        %v845 = vpop.permute.xlu0 %844
        %846 = vrot.lane.b32.xlu0 %v838, 9
        %v847 = vpop.permute.xlu0 %846
        %v852 = vsel %vm412, %v504, 0.0
        %v853 = vsel %vm412, %v612, 0.0
        %v854 = vsel %vm412, %v716, 0.0
        %v855 = vsel %vm412, %v820, 0.0
        %vm856 = vcmask 72704
        %v857 = vsel %vm856, %v852, %v841
        %v858 = vsel %vm856, %v853, %v843
        %v859 = vsel %vm856, %v854, %v845
        %v860 = vsel %vm856, %v855, %v847
        %vm861 = vcmask 138240
        %v862 = vsel %vm861, %v857, 0.0
        %v863 = vsel %vm861, %v858, 0.0
        %v864 = vsel %vm861, %v859, 0.0
        %v865 = vsel %vm861, %v860, 0.0
        %v866 = vlaneseq
        %v867 = vshrl.u32 %v866, 7
        %v868 = vadd.s32 %v867, 8
        %v869 = vadd.s32 %v867, 16
        %v870 = vadd.s32 %v867, 24
        %vm871 = vcmp.lt.s32.totalorder %v867, 0
        %v872 = vsub.s32 0, %v867
        %v873 = vsel %vm871, %v872, %v867
        %v874 = vshrl.u32 %v873, 3
        %v875 = vand.u32 %v873, 7
        %v876 = vsub.s32 0, %v875
        %v877 = vsel %vm871, %v876, %v875
        %vm878 = vcmp.lt.s32.totalorder %v868, 0
        %v879 = vsub.s32 0, %v868
        %v880 = vsel %vm878, %v879, %v868
        %v881 = vshrl.u32 %v880, 3
        %v882 = vand.u32 %v880, 7
        %v883 = vsub.s32 0, %v882
        %v884 = vsel %vm878, %v883, %v882
        %vm885 = vcmp.lt.s32.totalorder %v869, 0
        %v886 = vsub.s32 0, %v869
        %v887 = vsel %vm885, %v886, %v869
        %v888 = vshrl.u32 %v887, 3
        %v889 = vand.u32 %v887, 7
        %v890 = vsub.s32 0, %v889
        %v891 = vsel %vm885, %v890, %v889
        %vm892 = vcmp.lt.s32.totalorder %v870, 0
        %v893 = vsub.s32 0, %v870
        %v894 = vsel %vm892, %v893, %v870
        %v895 = vshrl.u32 %v894, 3
        %v896 = vand.u32 %v894, 7
        %v897 = vsub.s32 0, %v896
        %v898 = vsel %vm892, %v897, %v896
        %vm899 = vcmp.ne.s32.totalorder %v877, 0
        %vm900 = vcmp.ne.s32.totalorder %v884, 0
        %vm901 = vcmp.ne.s32.totalorder %v891, 0
        %vm902 = vcmp.ne.s32.totalorder %v898, 0
        %vm903 = vcmp.lt.s32.totalorder %v877, 0
        %vm904 = vcmp.lt.s32.totalorder %v884, 0
        %vm905 = vcmp.lt.s32.totalorder %v891, 0
        %vm906 = vcmp.lt.s32.totalorder %v898, 0
        %vm907 = vmand %vm903, %vm899
        %vm908 = vmand %vm904, %vm900
        %vm909 = vmand %vm905, %vm901
        %vm910 = vmand %vm906, %vm902
        %v911 = vadd.s32 %v877, 8
        %v912 = vadd.s32 %v884, 8
        %v913 = vadd.s32 %v891, 8
        %v914 = vadd.s32 %v898, 8
        %v915 = vsel %vm907, %v911, %v877
        %v916 = vsel %vm908, %v912, %v884
        %v917 = vsel %vm909, %v913, %v891
        %v918 = vsel %vm910, %v914, %v898
        %v919 = vsub.s32 7, %v915
        %v920 = vsub.s32 7, %v916
        %v921 = vsub.s32 7, %v917
        %v922 = vsub.s32 7, %v918
        %923 = vrot.lane.b32.xlu0 %v862, 127
        %v924 = vpop.permute.xlu0 %923
        %925 = vrot.lane.b32.xlu0 %v863, 127
        %v926 = vpop.permute.xlu0 %925
        %927 = vrot.lane.b32.xlu0 %v864, 127
        %v928 = vpop.permute.xlu0 %927
        %929 = vrot.lane.b32.xlu0 %v865, 127
        %v930 = vpop.permute.xlu0 %929
        %v931 = vand.u32 %v919, 1
        %v932 = vand.u32 %v920, 1
        %v933 = vand.u32 %v921, 1
        %v934 = vand.u32 %v922, 1
        %vm935 = vcmp.ne.s32.totalorder %v931, 0
        %vm936 = vcmp.ne.s32.totalorder %v932, 0
        %vm937 = vcmp.ne.s32.totalorder %v933, 0
        %vm938 = vcmp.ne.s32.totalorder %v934, 0
        %v939 = vsel %vm935, 1, 0
        %v940 = vsel %vm936, 1, 0
        %v941 = vsel %vm937, 1, 0
        %v942 = vsel %vm938, 1, 0
        %vm943 = vcmp.eq.s32.totalorder %v939, 1
        %vm944 = vcmp.eq.s32.totalorder %v940, 1
        %vm945 = vcmp.eq.s32.totalorder %v941, 1
        %vm946 = vcmp.eq.s32.totalorder %v942, 1
        %v947 = vsel %vm943, %v924, %v862
        %v948 = vsel %vm944, %v926, %v863
        %v949 = vsel %vm945, %v928, %v864
        %v950 = vsel %vm946, %v930, %v865
        %951 = vrot.lane.b32.xlu0 %v947, 126
        %v952 = vpop.permute.xlu0 %951
        %953 = vrot.lane.b32.xlu0 %v948, 126
        %v954 = vpop.permute.xlu0 %953
        %955 = vrot.lane.b32.xlu0 %v949, 126
        %v956 = vpop.permute.xlu0 %955
        %957 = vrot.lane.b32.xlu0 %v950, 126
        %v958 = vpop.permute.xlu0 %957
        %v959 = vand.u32 %v919, 2
        %v960 = vand.u32 %v920, 2
        %v961 = vand.u32 %v921, 2
        %v962 = vand.u32 %v922, 2
        %vm963 = vcmp.ne.s32.totalorder %v959, 0
        %vm964 = vcmp.ne.s32.totalorder %v960, 0
        %vm965 = vcmp.ne.s32.totalorder %v961, 0
        %vm966 = vcmp.ne.s32.totalorder %v962, 0
        %v967 = vsel %vm963, 1, 0
        %v968 = vsel %vm964, 1, 0
        %v969 = vsel %vm965, 1, 0
        %v970 = vsel %vm966, 1, 0
        %vm971 = vcmp.eq.s32.totalorder %v967, 1
        %vm972 = vcmp.eq.s32.totalorder %v968, 1
        %vm973 = vcmp.eq.s32.totalorder %v969, 1
        %vm974 = vcmp.eq.s32.totalorder %v970, 1
        %v975 = vsel %vm971, %v952, %v947
        %v976 = vsel %vm972, %v954, %v948
        %v977 = vsel %vm973, %v956, %v949
        %v978 = vsel %vm974, %v958, %v950
        %979 = vrot.lane.b32.xlu0 %v975, 124
        %v980 = vpop.permute.xlu0 %979
        %981 = vrot.lane.b32.xlu0 %v976, 124
        %v982 = vpop.permute.xlu0 %981
        %983 = vrot.lane.b32.xlu0 %v977, 124
        %v984 = vpop.permute.xlu0 %983
        %985 = vrot.lane.b32.xlu0 %v978, 124
        %v986 = vpop.permute.xlu0 %985
        %v987 = vand.u32 %v919, 4
        %v988 = vand.u32 %v920, 4
        %v989 = vand.u32 %v921, 4
        %v990 = vand.u32 %v922, 4
        %vm991 = vcmp.ne.s32.totalorder %v987, 0
        %vm992 = vcmp.ne.s32.totalorder %v988, 0
        %vm993 = vcmp.ne.s32.totalorder %v989, 0
        %vm994 = vcmp.ne.s32.totalorder %v990, 0
        %v995 = vsel %vm991, 1, 0
        %v996 = vsel %vm992, 1, 0
        %v997 = vsel %vm993, 1, 0
        %v998 = vsel %vm994, 1, 0
        %vm999 = vcmp.eq.s32.totalorder %v995, 1
        %vm1000 = vcmp.eq.s32.totalorder %v996, 1
        %vm1001 = vcmp.eq.s32.totalorder %v997, 1
        %vm1002 = vcmp.eq.s32.totalorder %v998, 1
        %v1003 = vsel %vm999, %v980, %v975
        %v1004 = vsel %vm1000, %v982, %v976
        %v1005 = vsel %vm1001, %v984, %v977
        %v1006 = vsel %vm1002, %v986, %v978
        %v1007 = vadd.f32 %v454, %v1003
        %v1008 = vadd.f32 %v555, %v1004
        %v1009 = vadd.f32 %v662, %v1005
        %v1010 = vadd.f32 %v766, %v1006
        %v1011 = vmul.f32 %v1007, 0.35355338
        %v1012 = vmul.f32 %v1008, 0.35355338
        %v1013 = vmul.f32 %v1009, 0.35355338
        %v1014 = vmul.f32 %v1010, 0.35355338
        %v1015 = vsel %vm412, %v1011, -inf
        %1016 = vmax.xlane.f32.xlu0 %v1015
        %v1017 = vpop.xlane.xlu0 %1016
        %v1018 = vsel %vm412, %v1012, -inf
        %1019 = vmax.xlane.f32.xlu0 %v1018
        %v1020 = vpop.xlane.xlu0 %1019
        %v1021 = vsel %vm412, %v1013, -inf
        %1022 = vmax.xlane.f32.xlu0 %v1021
        %v1023 = vpop.xlane.xlu0 %1022
        %v1024 = vsel %vm412, %v1014, -inf
        %1025 = vmax.xlane.f32.xlu0 %v1024
        %v1026 = vpop.xlane.xlu0 %1025
        %v1027 = vsub.f32 %v1011, %v1017
        %v1028 = vsub.f32 %v1012, %v1020
        %v1029 = vsub.f32 %v1013, %v1023
        %v1030 = vsub.f32 %v1014, %v1026
        %v1031 = vmul.f32 %v1027, 1.442695
        %v1032 = vpow.pop %v1031
        %v1033 = vmul.f32 %v1028, 1.442695
        %v1034 = vpow.pop %v1033
        %v1035 = vmul.f32 %v1029, 1.442695
        %v1036 = vpow.pop %v1035
        %v1037 = vmul.f32 %v1030, 1.442695
        %v1038 = vpow.pop %v1037
        %v1039 = vsel %vm412, %v1032, 0.0
        %1040 = vadd.xlane.f32.xlu0 %v1039
        %v1041 = vpop.xlane.xlu0 %1040
        %v1042 = vsel %vm412, %v1034, 0.0
        %1043 = vadd.xlane.f32.xlu0 %v1042
        %v1044 = vpop.xlane.xlu0 %1043
        %v1045 = vsel %vm412, %v1036, 0.0
        %1046 = vadd.xlane.f32.xlu0 %v1045
        %v1047 = vpop.xlane.xlu0 %1046
        %v1048 = vsel %vm412, %v1038, 0.0
        %1049 = vadd.xlane.f32.xlu0 %v1048
        %v1050 = vpop.xlane.xlu0 %1049
        %v1051 = vrcp.pop %v1041
        %v1052 = vrcp.pop %v1044
        %v1053 = vrcp.pop %v1047
        %v1054 = vrcp.pop %v1050
        %v1055 = vmul.f32 %v1032, %v1051
        %v1056 = vmul.f32 %v1034, %v1052
        %v1057 = vmul.f32 %v1036, %v1053
        %v1058 = vmul.f32 %v1038, %v1054
        %v1059 = vpack.c.bf16 %v1056, %v1055
        %v1060 = vpack.c.bf16 %v1058, %v1057
        %v1061 = vld [vmem:[#allocation7] sm:$0xf]
        %v1062 = vld [vmem:[#allocation7 + $0x4] sm:$0xf]
        %v1063 = vld [vmem:[#allocation7 + $0x8] sm:$0xf]
        %v1064 = vld [vmem:[#allocation7 + $0xc] sm:$0xf]
        %1065 = vrot.lane.b32.xlu0 %v405, 64
        %v1066 = vpop.permute.xlu0 %1065
        %v1068 = vsel %vm412, %v1059, 0
        %vm1070 = vcmask 1043456
        %v1072 = vsel %vm1070, %v1066, 0
        %1074 = vmatprep.subr.bf16.mxu0 0
        %1075 = vmatpush1.bf16.msra.mxu0 %v1072
        %1076 = vmatprep.subr.bf16.mxu0 0
        %1077 = vmatpush1.bf16.msra.mxu0 0
        %1078 = vmatprep.subr.bf16.mxu0 0
        %1079 = vmatpush1.bf16.msra.mxu0 0
        %1080 = vmatprep.subr.bf16.mxu0 0
        %1081 = vmatpush1.bf16.msra.mxu0 0
        %1082 = vmatprep.subr.bf16.mxu0 0
        %1083 = vmatpush1.bf16.msra.mxu0 0
        %1084 = vmatprep.subr.bf16.mxu0 0
        %1085 = vmatpush1.bf16.msra.mxu0 0
        %1086 = vmatprep.subr.bf16.mxu0 0
        %1087 = vmatpush1.bf16.msra.mxu0 0
        %1088 = vmatprep.subr.bf16.mxu0 0
        %1089 = vmatpush1.bf16.msra.mxu0 0
        %1090 = vmatprep.subr.bf16.mxu0 0
        %1091 = vmatpush1.bf16.msra.mxu0 0
        %1092 = vmatprep.subr.bf16.mxu0 0
        %1093 = vmatpush1.bf16.msra.mxu0 0
        %1094 = vmatprep.subr.bf16.mxu0 0
        %1095 = vmatpush1.bf16.msra.mxu0 0
        %1096 = vmatprep.subr.bf16.mxu0 0
        %1097 = vmatpush1.bf16.msra.mxu0 0
        %1098 = vmatprep.subr.bf16.mxu0 0
        %1099 = vmatpush1.bf16.msra.mxu0 0
        %1100 = vmatprep.subr.bf16.mxu0 0
        %1101 = vmatpush1.bf16.msra.mxu0 0
        %1102 = vmatprep.subr.bf16.mxu0 0
        %1103 = vmatpush1.bf16.msra.mxu0 0
        %1104 = vmatprep.subr.bf16.mxu0 0
        %1105 = vmatpush1.bf16.msra.mxu0 0
        %1106 = vmatprep.mubr.bf16.mxu0 0
        %1107 = vmatmul.mubr.bf16.gmra.mrb[0].mxu0 %v1068
        %v1108 = vpop.f32.mrb[0].mxu0
        %v1109 = vadd.f32 0.0, %v1108
        %v1110 = vpop.f32.mrb[0].mxu0
        %v1111 = vpop.f32.mrb[0].mxu0
        %v1112 = vpop.f32.mrb[0].mxu0
        %1113 = vdwg.mxu0
        %v1114 = vpack.c.bf16 %v1109, %v1109
        %v1116 = vrot.slane %v1059, 4
        %1117 = vrot.lane.b32.xlu0 %v405, 56
        %v1118 = vpop.permute.xlu0 %1117
        %v1120 = vsel %vm412, %v1116, 0
        %v1123 = vsel %vm1070, %v1118, 0
        %1125 = vmatprep.subr.bf16.mxu0 0
        %1126 = vmatpush1.bf16.msra.mxu0 %v1123
        %1127 = vmatprep.subr.bf16.mxu0 0
        %1128 = vmatpush1.bf16.msra.mxu0 0
        %1129 = vmatprep.subr.bf16.mxu0 0
        %1130 = vmatpush1.bf16.msra.mxu0 0
        %1131 = vmatprep.subr.bf16.mxu0 0
        %1132 = vmatpush1.bf16.msra.mxu0 0
        %1133 = vmatprep.subr.bf16.mxu0 0
        %1134 = vmatpush1.bf16.msra.mxu0 0
        %1135 = vmatprep.subr.bf16.mxu0 0
        %1136 = vmatpush1.bf16.msra.mxu0 0
        %1137 = vmatprep.subr.bf16.mxu0 0
        %1138 = vmatpush1.bf16.msra.mxu0 0
        %1139 = vmatprep.subr.bf16.mxu0 0
        %1140 = vmatpush1.bf16.msra.mxu0 0
        %1141 = vmatprep.subr.bf16.mxu0 0
        %1142 = vmatpush1.bf16.msra.mxu0 0
        %1143 = vmatprep.subr.bf16.mxu0 0
        %1144 = vmatpush1.bf16.msra.mxu0 0
        %1145 = vmatprep.subr.bf16.mxu0 0
        %1146 = vmatpush1.bf16.msra.mxu0 0
        %1147 = vmatprep.subr.bf16.mxu0 0
        %1148 = vmatpush1.bf16.msra.mxu0 0
        %1149 = vmatprep.subr.bf16.mxu0 0
        %1150 = vmatpush1.bf16.msra.mxu0 0
        %1151 = vmatprep.subr.bf16.mxu0 0
        %1152 = vmatpush1.bf16.msra.mxu0 0
        %1153 = vmatprep.subr.bf16.mxu0 0
        %1154 = vmatpush1.bf16.msra.mxu0 0
        %1155 = vmatprep.subr.bf16.mxu0 0
        %1156 = vmatpush1.bf16.msra.mxu0 0
        %1157 = vmatprep.mubr.bf16.mxu0 0
        %1158 = vmatmul.mubr.bf16.gmra.mrb[0].mxu0 %v1120
        %v1159 = vpop.f32.mrb[0].mxu0
        %v1160 = vadd.f32 0.0, %v1159
        %v1161 = vpop.f32.mrb[0].mxu0
        %v1162 = vpop.f32.mrb[0].mxu0
        %v1163 = vpop.f32.mrb[0].mxu0
        %1164 = vdwg.mxu0
        %v1165 = vpack.c.bf16 %v1160, %v1160
        %v1167 = vsel %vm412, %v1165, 0
        %v1170 = vsel %vm1070, %v1062, 0
        %1172 = vmatprep.subr.bf16.mxu0 0
        %1173 = vmatpush1.bf16.msra.mxu0 %v1170
        %1174 = vmatprep.subr.bf16.mxu0 0
        %1175 = vmatpush1.bf16.msra.mxu0 0
        %1176 = vmatprep.subr.bf16.mxu0 0
        %1177 = vmatpush1.bf16.msra.mxu0 0
        %1178 = vmatprep.subr.bf16.mxu0 0
        %1179 = vmatpush1.bf16.msra.mxu0 0
        %1180 = vmatprep.subr.bf16.mxu0 0
        %1181 = vmatpush1.bf16.msra.mxu0 0
        %1182 = vmatprep.subr.bf16.mxu0 0
        %1183 = vmatpush1.bf16.msra.mxu0 0
        %1184 = vmatprep.subr.bf16.mxu0 0
        %1185 = vmatpush1.bf16.msra.mxu0 0
        %1186 = vmatprep.subr.bf16.mxu0 0
        %1187 = vmatpush1.bf16.msra.mxu0 0
        %1188 = vmatprep.subr.bf16.mxu0 0
        %1189 = vmatpush1.bf16.msra.mxu0 0
        %1190 = vmatprep.subr.bf16.mxu0 0
        %1191 = vmatpush1.bf16.msra.mxu0 0
        %1192 = vmatprep.subr.bf16.mxu0 0
        %1193 = vmatpush1.bf16.msra.mxu0 0
        %1194 = vmatprep.subr.bf16.mxu0 0
        %1195 = vmatpush1.bf16.msra.mxu0 0
        %1196 = vmatprep.subr.bf16.mxu0 0
        %1197 = vmatpush1.bf16.msra.mxu0 0
        %1198 = vmatprep.subr.bf16.mxu0 0
        %1199 = vmatpush1.bf16.msra.mxu0 0
        %1200 = vmatprep.subr.bf16.mxu0 0
        %1201 = vmatpush1.bf16.msra.mxu0 0
        %1202 = vmatprep.subr.bf16.mxu0 0
        %1203 = vmatpush1.bf16.msra.mxu0 0
        %1204 = vmatprep.mubr.bf16.mxu0 0
        %1205 = vmatmul.mubr.bf16.gmra.mrb[0].mxu0 %v1167
        %v1206 = vpop.f32.mrb[0].mxu0
        %v1207 = vadd.f32 0.0, %v1206
        %v1208 = vpop.f32.mrb[0].mxu0
        %v1209 = vpop.f32.mrb[0].mxu0
        %v1210 = vpop.f32.mrb[0].mxu0
        %1211 = vdwg.mxu0
        %v1213 = vsel %vm412, %v1114, 0
        %v1216 = vsel %vm1070, %v1061, 0
        %1218 = vmatprep.subr.bf16.mxu0 0
        %1219 = vmatpush1.bf16.msra.mxu0 %v1216
        %1220 = vmatprep.subr.bf16.mxu0 0
        %1221 = vmatpush1.bf16.msra.mxu0 0
        %1222 = vmatprep.subr.bf16.mxu0 0
        %1223 = vmatpush1.bf16.msra.mxu0 0
        %1224 = vmatprep.subr.bf16.mxu0 0
        %1225 = vmatpush1.bf16.msra.mxu0 0
        %1226 = vmatprep.subr.bf16.mxu0 0
        %1227 = vmatpush1.bf16.msra.mxu0 0
        %1228 = vmatprep.subr.bf16.mxu0 0
        %1229 = vmatpush1.bf16.msra.mxu0 0
        %1230 = vmatprep.subr.bf16.mxu0 0
        %1231 = vmatpush1.bf16.msra.mxu0 0
        %1232 = vmatprep.subr.bf16.mxu0 0
        %1233 = vmatpush1.bf16.msra.mxu0 0
        %1234 = vmatprep.subr.bf16.mxu0 0
        %1235 = vmatpush1.bf16.msra.mxu0 0
        %1236 = vmatprep.subr.bf16.mxu0 0
        %1237 = vmatpush1.bf16.msra.mxu0 0
        %1238 = vmatprep.subr.bf16.mxu0 0
        %1239 = vmatpush1.bf16.msra.mxu0 0
        %1240 = vmatprep.subr.bf16.mxu0 0
        %1241 = vmatpush1.bf16.msra.mxu0 0
        %1242 = vmatprep.subr.bf16.mxu0 0
        %1243 = vmatpush1.bf16.msra.mxu0 0
        %1244 = vmatprep.subr.bf16.mxu0 0
        %1245 = vmatpush1.bf16.msra.mxu0 0
        %1246 = vmatprep.subr.bf16.mxu0 0
        %1247 = vmatpush1.bf16.msra.mxu0 0
        %1248 = vmatprep.subr.bf16.mxu0 0
        %1249 = vmatpush1.bf16.msra.mxu0 0
        %1250 = vmatprep.mubr.bf16.mxu0 0
        %1251 = vmatmul.mubr.bf16.gmra.mrb[0].mxu0 %v1213
        %v1252 = vpop.f32.mrb[0].mxu0
        %v1253 = vadd.f32 %v1207, %v1252
        %v1254 = vpop.f32.mrb[0].mxu0
        %v1255 = vpop.f32.mrb[0].mxu0
        %v1256 = vpop.f32.mrb[0].mxu0
        %1257 = vdwg.mxu0
        %1258 = vrot.lane.b32.xlu0 %v405, 48
        %v1259 = vpop.permute.xlu0 %1258
        %v1261 = vsel %vm412, %v1060, 0
        %v1264 = vsel %vm1070, %v1259, 0
        %1266 = vmatprep.subr.bf16.mxu0 0
        %1267 = vmatpush1.bf16.msra.mxu0 %v1264
        %1268 = vmatprep.subr.bf16.mxu0 0
        %1269 = vmatpush1.bf16.msra.mxu0 0
        %1270 = vmatprep.subr.bf16.mxu0 0
        %1271 = vmatpush1.bf16.msra.mxu0 0
        %1272 = vmatprep.subr.bf16.mxu0 0
        %1273 = vmatpush1.bf16.msra.mxu0 0
        %1274 = vmatprep.subr.bf16.mxu0 0
        %1275 = vmatpush1.bf16.msra.mxu0 0
        %1276 = vmatprep.subr.bf16.mxu0 0
        %1277 = vmatpush1.bf16.msra.mxu0 0
        %1278 = vmatprep.subr.bf16.mxu0 0
        %1279 = vmatpush1.bf16.msra.mxu0 0
        %1280 = vmatprep.subr.bf16.mxu0 0
        %1281 = vmatpush1.bf16.msra.mxu0 0
        %1282 = vmatprep.subr.bf16.mxu0 0
        %1283 = vmatpush1.bf16.msra.mxu0 0
        %1284 = vmatprep.subr.bf16.mxu0 0
        %1285 = vmatpush1.bf16.msra.mxu0 0
        %1286 = vmatprep.subr.bf16.mxu0 0
        %1287 = vmatpush1.bf16.msra.mxu0 0
        %1288 = vmatprep.subr.bf16.mxu0 0
        %1289 = vmatpush1.bf16.msra.mxu0 0
        %1290 = vmatprep.subr.bf16.mxu0 0
        %1291 = vmatpush1.bf16.msra.mxu0 0
        %1292 = vmatprep.subr.bf16.mxu0 0
        %1293 = vmatpush1.bf16.msra.mxu0 0
        %1294 = vmatprep.subr.bf16.mxu0 0
        %1295 = vmatpush1.bf16.msra.mxu0 0
        %1296 = vmatprep.subr.bf16.mxu0 0
        %1297 = vmatpush1.bf16.msra.mxu0 0
        %1298 = vmatprep.mubr.bf16.mxu0 0
        %1299 = vmatmul.mubr.bf16.gmra.mrb[0].mxu0 %v1261
        %v1300 = vpop.f32.mrb[0].mxu0
        %v1301 = vadd.f32 0.0, %v1300
        %v1302 = vpop.f32.mrb[0].mxu0
        %v1303 = vpop.f32.mrb[0].mxu0
        %v1304 = vpop.f32.mrb[0].mxu0
        %1305 = vdwg.mxu0
        %v1306 = vpack.c.bf16 %v1301, %v1301
        %v1308 = vsel %vm412, %v1306, 0
        %v1311 = vsel %vm1070, %v1063, 0
        %1313 = vmatprep.subr.bf16.mxu0 0
        %1314 = vmatpush1.bf16.msra.mxu0 %v1311
        %1315 = vmatprep.subr.bf16.mxu0 0
        %1316 = vmatpush1.bf16.msra.mxu0 0
        %1317 = vmatprep.subr.bf16.mxu0 0
        %1318 = vmatpush1.bf16.msra.mxu0 0
        %1319 = vmatprep.subr.bf16.mxu0 0
        %1320 = vmatpush1.bf16.msra.mxu0 0
        %1321 = vmatprep.subr.bf16.mxu0 0
        %1322 = vmatpush1.bf16.msra.mxu0 0
        %1323 = vmatprep.subr.bf16.mxu0 0
        %1324 = vmatpush1.bf16.msra.mxu0 0
        %1325 = vmatprep.subr.bf16.mxu0 0
        %1326 = vmatpush1.bf16.msra.mxu0 0
        %1327 = vmatprep.subr.bf16.mxu0 0
        %1328 = vmatpush1.bf16.msra.mxu0 0
        %1329 = vmatprep.subr.bf16.mxu0 0
        %1330 = vmatpush1.bf16.msra.mxu0 0
        %1331 = vmatprep.subr.bf16.mxu0 0
        %1332 = vmatpush1.bf16.msra.mxu0 0
        %1333 = vmatprep.subr.bf16.mxu0 0
        %1334 = vmatpush1.bf16.msra.mxu0 0
        %1335 = vmatprep.subr.bf16.mxu0 0
        %1336 = vmatpush1.bf16.msra.mxu0 0
        %1337 = vmatprep.subr.bf16.mxu0 0
        %1338 = vmatpush1.bf16.msra.mxu0 0
        %1339 = vmatprep.subr.bf16.mxu0 0
        %1340 = vmatpush1.bf16.msra.mxu0 0
        %1341 = vmatprep.subr.bf16.mxu0 0
        %1342 = vmatpush1.bf16.msra.mxu0 0
        %1343 = vmatprep.subr.bf16.mxu0 0
        %1344 = vmatpush1.bf16.msra.mxu0 0
        %1345 = vmatprep.mubr.bf16.mxu0 0
        %1346 = vmatmul.mubr.bf16.gmra.mrb[0].mxu0 %v1308
        %v1347 = vpop.f32.mrb[0].mxu0
        %v1348 = vadd.f32 0.0, %v1347
        %v1349 = vpop.f32.mrb[0].mxu0
        %v1350 = vpop.f32.mrb[0].mxu0
        %v1351 = vpop.f32.mrb[0].mxu0
        %1352 = vdwg.mxu0
        %v1353 = vadd.f32 %v1253, %v1348
        %v1355 = vrot.slane %v1060, 4
        %1356 = vrot.lane.b32.xlu0 %v405, 40
        %v1357 = vpop.permute.xlu0 %1356
        %v1359 = vsel %vm412, %v1355, 0
        %v1362 = vsel %vm1070, %v1357, 0
        %1364 = vmatprep.subr.bf16.mxu0 0
        %1365 = vmatpush1.bf16.msra.mxu0 %v1362
        %1366 = vmatprep.subr.bf16.mxu0 0
        %1367 = vmatpush1.bf16.msra.mxu0 0
        %1368 = vmatprep.subr.bf16.mxu0 0
        %1369 = vmatpush1.bf16.msra.mxu0 0
        %1370 = vmatprep.subr.bf16.mxu0 0
        %1371 = vmatpush1.bf16.msra.mxu0 0
        %1372 = vmatprep.subr.bf16.mxu0 0
        %1373 = vmatpush1.bf16.msra.mxu0 0
        %1374 = vmatprep.subr.bf16.mxu0 0
        %1375 = vmatpush1.bf16.msra.mxu0 0
        %1376 = vmatprep.subr.bf16.mxu0 0
        %1377 = vmatpush1.bf16.msra.mxu0 0
        %1378 = vmatprep.subr.bf16.mxu0 0
        %1379 = vmatpush1.bf16.msra.mxu0 0
        %1380 = vmatprep.subr.bf16.mxu0 0
        %1381 = vmatpush1.bf16.msra.mxu0 0
        %1382 = vmatprep.subr.bf16.mxu0 0
        %1383 = vmatpush1.bf16.msra.mxu0 0
        %1384 = vmatprep.subr.bf16.mxu0 0
        %1385 = vmatpush1.bf16.msra.mxu0 0
        %1386 = vmatprep.subr.bf16.mxu0 0
        %1387 = vmatpush1.bf16.msra.mxu0 0
        %1388 = vmatprep.subr.bf16.mxu0 0
        %1389 = vmatpush1.bf16.msra.mxu0 0
        %1390 = vmatprep.subr.bf16.mxu0 0
        %1391 = vmatpush1.bf16.msra.mxu0 0
        %1392 = vmatprep.subr.bf16.mxu0 0
        %1393 = vmatpush1.bf16.msra.mxu0 0
        %1394 = vmatprep.subr.bf16.mxu0 0
        %1395 = vmatpush1.bf16.msra.mxu0 0
        %1396 = vmatprep.mubr.bf16.mxu0 0
        %1397 = vmatmul.mubr.bf16.gmra.mrb[0].mxu0 %v1359
        %v1398 = vpop.f32.mrb[0].mxu0
        %v1399 = vadd.f32 0.0, %v1398
        %v1400 = vpop.f32.mrb[0].mxu0
        %v1401 = vpop.f32.mrb[0].mxu0
        %v1402 = vpop.f32.mrb[0].mxu0
        %1403 = vdwg.mxu0
        %v1404 = vpack.c.bf16 %v1399, %v1399
        %v1406 = vsel %vm412, %v1404, 0
        %v1409 = vsel %vm1070, %v1064, 0
        %1411 = vmatprep.subr.bf16.mxu0 0
        %1412 = vmatpush1.bf16.msra.mxu0 %v1409
        %1413 = vmatprep.subr.bf16.mxu0 0
        %1414 = vmatpush1.bf16.msra.mxu0 0
        %1415 = vmatprep.subr.bf16.mxu0 0
        %1416 = vmatpush1.bf16.msra.mxu0 0
        %1417 = vmatprep.subr.bf16.mxu0 0
        %1418 = vmatpush1.bf16.msra.mxu0 0
        %1419 = vmatprep.subr.bf16.mxu0 0
        %1420 = vmatpush1.bf16.msra.mxu0 0
        %1421 = vmatprep.subr.bf16.mxu0 0
        %1422 = vmatpush1.bf16.msra.mxu0 0
        %1423 = vmatprep.subr.bf16.mxu0 0
        %1424 = vmatpush1.bf16.msra.mxu0 0
        %1425 = vmatprep.subr.bf16.mxu0 0
        %1426 = vmatpush1.bf16.msra.mxu0 0
        %1427 = vmatprep.subr.bf16.mxu0 0
        %1428 = vmatpush1.bf16.msra.mxu0 0
        %1429 = vmatprep.subr.bf16.mxu0 0
        %1430 = vmatpush1.bf16.msra.mxu0 0
        %1431 = vmatprep.subr.bf16.mxu0 0
        %1432 = vmatpush1.bf16.msra.mxu0 0
        %1433 = vmatprep.subr.bf16.mxu0 0
        %1434 = vmatpush1.bf16.msra.mxu0 0
        %1435 = vmatprep.subr.bf16.mxu0 0
        %1436 = vmatpush1.bf16.msra.mxu0 0
        %1437 = vmatprep.subr.bf16.mxu0 0
        %1438 = vmatpush1.bf16.msra.mxu0 0
        %1439 = vmatprep.subr.bf16.mxu0 0
        %1440 = vmatpush1.bf16.msra.mxu0 0
        %1441 = vmatprep.subr.bf16.mxu0 0
        %1442 = vmatpush1.bf16.msra.mxu0 0
        %1443 = vmatprep.mubr.bf16.mxu0 0
        %1444 = vmatmul.mubr.bf16.gmra.mrb[0].mxu0 %v1406
        %v1445 = vpop.f32.mrb[0].mxu0
        %v1446 = vadd.f32 0.0, %v1445
        %v1447 = vpop.f32.mrb[0].mxu0
        %v1448 = vpop.f32.mrb[0].mxu0
        %v1449 = vpop.f32.mrb[0].mxu0
        %1450 = vdwg.mxu0
        %v1451 = vadd.f32 %v1353, %v1446
        %1452 = vst.msk [vmem:[%s333] sm:$0xff] %vm353, %v1451
        %s1453 = sand.u32 %s165, 1
        %s1454 = scalar_lea.sflag [#allocation4], %s1453
        %s1455 = sand.u32 %s165, 1
        %s1456 = smul.addr %s1455, 8
        %s1457 = scalar_lea.vmem [#allocation13], %s1456
        // Predicated region
        $region69: #{tpu_custom_call.1} parent=43 // pred_check
          %p1458 = pneg %p175
        $region70: #{tpu_custom_call.1} parent=43 // pred_check_branch
          %1460 = sbr.rel (%p1458) target = $region72
        $region71: #{tpu_custom_call.1} parent=43 // pred_region
          %s1462 = ssub.s32 128, 128
          %1463 = vsyncadd %s1454, %s1462
          %s1464 = smul.addr %s26, 128
          %s1465 = scalar_lea.hbm %s6, %s1464
          %s1467 = sshll.u32 %s1457, 4
          %s1468 = int_to_ptr.vmem [resolvable:$true] %s1467
          %1470 = dma.vmem_to_hbm [thread:$0]  %s1468, 128, %s1465, %s1454
        $region72: #{tpu_custom_call.1} parent=43 // pred_fallthru
          _
      $region44: #{tpu_custom_call.1} parent=5 // pred_fallthru
        _
      %p1471 = scmp.le.s32.totalorder 2, %s21
      // Predicated region
      $region73: #{tpu_custom_call.1} parent=5 // pred_check
        %p1472 = pneg %p1471
      $region74: #{tpu_custom_call.1} parent=5 // pred_check_branch
        %1474 = sbr.rel (%p1472) target = $region76
      $region75: #{tpu_custom_call.1} parent=5 // pred_region
        %s1475 = ssub.s32 %s21, 2
        // Predicated region
        $region77: #{tpu_custom_call.1} parent=75 // pred_check
          %p1476 = pneg %p181
        $region78: #{tpu_custom_call.1} parent=75 // pred_check_branch
          %1478 = sbr.rel (%p1476) target = $region80
        $region79: #{tpu_custom_call.1} parent=75 // pred_region
          %s1479 = sand.u32 %s166, 1
          %s1480 = scalar_lea.sflag [#allocation4], %s1479
          %s1481 = sand.u32 %s166, 1
          %s1482 = smul.addr %s1481, 8
          %s1483 = scalar_lea.vmem [#allocation13], %s1482
          %1484 = dma.done %s1480, 128
        $region80: #{tpu_custom_call.1} parent=75 // pred_fallthru
          _
      $region76: #{tpu_custom_call.1} parent=5 // pred_fallthru
        _
    $region6: #{tpu_custom_call.1} parent=1 // loop_footer
      %s25 = sadd.s32 1, %s21
    $region7: #{tpu_custom_call.1} parent=1 // loop_footer_branch
      %20 = sbr.rel target = $region3
    $region8: #{tpu_custom_call.1} parent=1 // loop_exit
      _
    %1485 = vsyncpa [#allocation3], 1
    %s1486 = scalar_lea.sflag [#allocation3], 1
    %1487 = vsyncpa %s1486, 1
    %1488 = vsyncpa [#allocation6], 1
    %1489 = vsyncpa [#allocation9], 1
    %1490 = vsyncpa [#allocation12], 1
    %1491 = vsyncpa [#allocation4], 1
    %s1492 = scalar_lea.sflag [#allocation4], 1
    %1493 = vsyncpa %s1492, 1

</llo_original>
